<compile_context>
chip_gen: v6e
topology: v6e:2x2x1
jax: 0.10.0
libtpu: 0.0.40
codegen_flags: <defaults>
</compile_context>

<pallas_src>
import jax
import jax.numpy as jnp
from jax.experimental import pallas as pl
from jax.experimental.pallas import tpu as pltpu

REL_WORDS = 10
T = REL_WORDS + 1      # sequence length / input BatchNorm1d channels
F = 16                 # clf.input_size
H = 32                 # clf.params.hidden_units
NCLS = 3               # clf.n_classes
D = 2 * H + 1          # head width (65)
HEAD_PAD = 128         # lane-padded head width
G = 8 * H              # both directions x 4 gates = 256 lanes
EPS = 1e-5             # PyTorch BatchNorm default eps


def _round_up(n, m):
    return ((n + m - 1) // m) * m


# ---------------------------------------------------------------------------
# Fused kernel: (folded) input BN + both LSTMs + (folded-BN) head MLP + softmax.
#   x_ref      : [T, TB, 2F] bf16   lanes 0:F = fwd dir, F:2F = bwd dir
#   lemma_ref  : [TB, 1]     f32
#   wih_ref    : [2F, G] bf16       combined input-projection weight (0.5 sigmoid
#                                   pre-scale folded into i/f/o gate columns)
#   whh_ref    : [2H, G] bf16       block-diagonal recurrent weight (same folding)
#   projc_ref  : [2T+2, G] f32      rows 0:T   = per-t input-BN scale
#                                   rows T:2T  = per-t input-BN shift + LSTM biases
#                                   row 2T     = gate post-scale (0.5 / 1.0)
#                                   row 2T+1   = gate post-shift (0.5 / 0.0)
#   w1h_ref    : [2H, 128] bf16     BN1-folded Linear1 rows for h
#   w2_ref     : [128, 128] bf16    BN2-folded Linear2 (rows :D, cols :NCLS real)
#   headv_ref  : [8, 128]  f32      row0 = b1', row1 = W1 lemma row, row2 = b2'
#                                   (b2' padded class lanes = -1e30 -> exp = 0)
#   out_ref    : [TB, 128] f32      softmax probs in lanes 0:NCLS
#   gsrc_ref   : [T, TB, G] f32     VMEM scratch (staged gate sources)
# Gate column layout (width 2H each, fwd|bwd interleave inside): [ i | f | g | o ]
# so the h/c carry is [h_f | h_b] = exactly the torch hidden_concat.
# ---------------------------------------------------------------------------
def fused_lstm_head_kernel(x_ref, lemma_ref, wih_ref, whh_ref, projc_ref,
                           w1h_ref, w2_ref, headv_ref, out_ref, gsrc_ref):
    Tt, TB, F2 = x_ref.shape
    H2 = whh_ref.shape[0]          # 2H = 64

    projc = projc_ref[...]
    pscale = projc[0:Tt, :]                       # [T, G]
    pshift = projc[Tt:2 * Tt, :]                  # [T, G]
    post_s = projc[2 * Tt:2 * Tt + 1, :]          # [1, G]
    post_t = projc[2 * Tt + 1:2 * Tt + 2, :]      # [1, G]

    # ---- hoisted input projection: one MXU matmul over all timesteps ----
    x2d = x_ref[...].reshape(Tt * TB, F2)                          # bf16
    xmm = jnp.dot(x2d, wih_ref[...], preferred_element_type=jnp.float32)
    xmm = xmm.reshape(Tt, TB, wih_ref.shape[1])
    # fold input BatchNorm (per-t scale/shift) + LSTM biases; stage in VMEM scratch
    gsrc_ref[...] = xmm * pscale[:, None, :] + pshift[:, None, :]

    whh = whh_ref[...]                                             # [2H, G] bf16

    # ---- serial recurrence: one 256-wide matmul + one 256-wide tanh per step ----
    def step(t, carry):
        h, c = carry
        rec = jnp.dot(h.astype(jnp.bfloat16), whh,
                      preferred_element_type=jnp.float32)          # [TB, G]
        act = jnp.tanh(gsrc_ref[t] + rec)                          # full-width tanh
        act = act * post_s + post_t           # sigmoid lanes: 0.5*tanh(x/2)+0.5
        i_g = act[:, 0 * H2:1 * H2]
        f_g = act[:, 1 * H2:2 * H2]
        g_g = act[:, 2 * H2:3 * H2]
        o_g = act[:, 3 * H2:4 * H2]
        c = f_g * c + i_g * g_g
        h = o_g * jnp.tanh(c)
        return h, c

    h0 = jnp.zeros((TB, H2), jnp.float32)
    c0 = jnp.zeros((TB, H2), jnp.float32)
    h, _ = jax.lax.fori_loop(0, Tt, step, (h0, c0), unroll=True)
    # h == [hn_fwd | hn_bckwd]   [TB, 2H]

    # ---- head: (BN-folded) Linear -> ReLU -> (BN-folded) Linear -> Softmax ----
    headv = headv_ref[...]
    b1 = headv[0:1, :]
    w1lem = headv[1:2, :]
    b2 = headv[2:3, :]

    y = jnp.dot(h.astype(jnp.bfloat16), w1h_ref[...],
                preferred_element_type=jnp.float32)
    y = y + lemma_ref[...] * w1lem + b1
    y = jnp.maximum(y, 0.0)
    logits = jnp.dot(y.astype(jnp.bfloat16), w2_ref[...],
                     preferred_element_type=jnp.float32) + b2
    # padded class lanes carry a -1e30 bias -> exp() == 0, softmax over real classes
    z = logits - jnp.max(logits, axis=-1, keepdims=True)
    e = jnp.exp(z)
    out_ref[...] = e / jnp.sum(e, axis=-1, keepdims=True)          # exact normalize


# ---------------------------------------------------------------------------
# Wrapper
# ---------------------------------------------------------------------------
@jax.jit
def lstm_model_forward(x, kp):
    B = x.shape[0]
    # Tile selection: minimize batch padding; >=2 tiles for B>128 so both v7x
    # TensorCores get work; TB<=512 keeps the gsrc scratch (<6 MB) under v5e's
    # 16 MiB default scoped-VMEM limit.
    if B <= 128:
        n_tiles = 1
    else:
        n_tiles = max(2, (B + 511) // 512)
    TB = _round_up((B + n_tiles - 1) // n_tiles, 8)
    B_pad = TB * n_tiles

    # layout plumbing (one fused XLA copy): [B,2,T,F] -> bf16 [T, B, 2F]; skip x[:,2].
    x_tbf = jnp.transpose(x[:, :2], (2, 0, 1, 3)).reshape(T, B, 2 * F)
    x_tbf = x_tbf.astype(jnp.bfloat16)
    lemma = x[:, 2, 0:1, 0]                                   # [B, 1] f32
    if B_pad != B:
        x_tbf = jnp.pad(x_tbf, ((0, 0), (0, B_pad - B), (0, 0)))
        lemma = jnp.pad(lemma, ((0, B_pad - B), (0, 0)))

    const = lambda shape: pl.BlockSpec(shape, lambda i: tuple(0 for _ in shape))

    out_pad = pl.pallas_call(
        fused_lstm_head_kernel,
        out_shape=jax.ShapeDtypeStruct((B_pad, HEAD_PAD), jnp.float32),
        grid=(n_tiles,),
        in_specs=[
            pl.BlockSpec((T, TB, 2 * F), lambda i: (0, i, 0)),   # x (bf16)
            pl.BlockSpec((TB, 1), lambda i: (i, 0)),             # lemma
            const((2 * F, G)),                                   # wih (bf16)
            const((2 * H, G)),                                   # whh (bf16)
            const((2 * T + 2, G)),                               # pscale/pshift/post
            const((2 * H, HEAD_PAD)),                            # w1h (bf16)
            const((HEAD_PAD, HEAD_PAD)),                         # w2  (bf16)
            const((8, HEAD_PAD)),                                # b1' / w1_lemma / b2'
        ],
        out_specs=pl.BlockSpec((TB, HEAD_PAD), lambda i: (i, 0)),
        scratch_shapes=[pltpu.VMEM((T, TB, G), jnp.float32)],
        compiler_params=pltpu.CompilerParams(
            dimension_semantics=("parallel",)),
    )(x_tbf, lemma, kp["wih"], kp["whh"], kp["projc"],
      kp["w1h"], kp["w2"], kp["headv"])

    return out_pad[:B, :NCLS]


# ---------------------------------------------------------------------------
# Parameters: raw (torch-layout, BN folded to scale/shift) + packed kernel form
# ---------------------------------------------------------------------------
def init_params(key):
    keys = jax.random.split(key, 32)
    ki = iter(keys)

    def u(shape, scale=0.2):
        return jax.random.uniform(next(ki), shape, jnp.float32, -scale, scale)

    def bn_affine(n):
        gamma = 1.0 + u((n,), 0.1)
        beta = u((n,), 0.1)
        mean = u((n,), 0.1)
        var = 1.0 + u((n,), 0.1) ** 2
        s = gamma / jnp.sqrt(var + EPS)
        t = beta - mean * s
        return s, t

    s_in, t_in = bn_affine(T)
    raw = dict(bn_in_s=s_in, bn_in_t=t_in)
    for d in ("f", "b"):
        raw[f"wih_{d}"] = u((4 * H, F))
        raw[f"whh_{d}"] = u((4 * H, H))
        raw[f"bih_{d}"] = u((4 * H,))
        raw[f"bhh_{d}"] = u((4 * H,))
    s1, t1 = bn_affine(D)
    raw.update(bn1_s=s1, bn1_t=t1, w1=u((D, D)), b1=u((D,)))
    s2, t2 = bn_affine(D)
    raw.update(bn2_s=s2, bn2_t=t2, w2=u((NCLS, D)), b2=u((NCLS,)))
    return raw


def pack_params(raw):
    H2 = 2 * H
    wih_all = jnp.zeros((2 * F, G), jnp.float32)
    whh_all = jnp.zeros((2 * H, G), jnp.float32)
    bias_all = jnp.zeros((G,), jnp.float32)
    dirs = [(raw["wih_f"], raw["whh_f"], raw["bih_f"], raw["bhh_f"]),
            (raw["wih_b"], raw["whh_b"], raw["bih_b"], raw["bhh_b"])]
    for d, (wih, whh, bih, bhh) in enumerate(dirs):
        for g in range(4):                      # torch gate order (i, f, g, o)
            c0 = g * H2 + d * H
            wih_all = wih_all.at[d * F:(d + 1) * F, c0:c0 + H].set(
                wih[g * H:(g + 1) * H, :].T)
            whh_all = whh_all.at[d * H:(d + 1) * H, c0:c0 + H].set(
                whh[g * H:(g + 1) * H, :].T)
            bias_all = bias_all.at[c0:c0 + H].set(
                bih[g * H:(g + 1) * H] + bhh[g * H:(g + 1) * H])

    # sigmoid(x) = 0.5*tanh(x/2)+0.5 : fold the 0.5 pre-scale (i/f/o gate lanes) into
    # the weights/bias, keep the post affine as per-lane scale/shift vectors.
    half = jnp.full((H2,), 0.5, jnp.float32)
    one = jnp.ones((H2,), jnp.float32)
    zero = jnp.zeros((H2,), jnp.float32)
    q = jnp.concatenate([half, half, one, half])          # pre-scale per lane
    post_s = q
    post_t = jnp.concatenate([half, half, zero, half])

    wih_s = wih_all * q[None, :]
    whh_s = whh_all * q[None, :]
    bias_s = bias_all * q

    # fold input BN (channel == timestep) into post-matmul scale/shift (+ biases)
    colsum = jnp.sum(wih_s, axis=0)                                   # [G]
    pscale = jnp.broadcast_to(raw["bn_in_s"][:, None], (T, G)).astype(jnp.float32)
    pshift = raw["bn_in_t"][:, None] * colsum[None, :] + bias_s[None, :]
    projc = jnp.concatenate(
        [pscale, pshift, post_s[None, :], post_t[None, :]], axis=0)   # [2T+2, G]

    # head: fold BN1 into Linear1 and BN2 into Linear2 (inference-mode running stats)
    A1 = raw["bn1_s"][:, None] * raw["w1"].T            # [D, D]  rows = input dims
    b1p = raw["bn1_t"] @ raw["w1"].T + raw["b1"]        # [D]
    A2 = raw["bn2_s"][:, None] * raw["w2"].T            # [D, NCLS]
    b2p = raw["bn2_t"] @ raw["w2"].T + raw["b2"]        # [NCLS]

    w1h = jnp.zeros((H2, HEAD_PAD), jnp.float32).at[:, :D].set(A1[:H2, :])
    w1lem = jnp.zeros((HEAD_PAD,), jnp.float32).at[:D].set(A1[H2, :])
    b1v = jnp.zeros((HEAD_PAD,), jnp.float32).at[:D].set(b1p)
    w2p = jnp.zeros((HEAD_PAD, HEAD_PAD), jnp.float32).at[:D, :NCLS].set(A2)
    b2v = jnp.full((HEAD_PAD,), -1e30, jnp.float32).at[:NCLS].set(b2p)

    headv = jnp.zeros((8, HEAD_PAD), jnp.float32)
    headv = headv.at[0].set(b1v).at[1].set(w1lem).at[2].set(b2v)

    return dict(
        wih=wih_s.astype(jnp.bfloat16),
        whh=whh_s.astype(jnp.bfloat16),
        projc=projc,
        w1h=w1h.astype(jnp.bfloat16),
        w2=w2p.astype(jnp.bfloat16),
        headv=headv,
    )


# ---------------------------------------------------------------------------
# Pure-JAX reference (mirrors the PyTorch forward, f32 everywhere)
# ---------------------------------------------------------------------------
def reference_forward(x, raw):
    s_in, t_in = raw["bn_in_s"], raw["bn_in_t"]
    xf = x[:, 0] * s_in[None, :, None] + t_in[None, :, None]
    xb = x[:, 1] * s_in[None, :, None] + t_in[None, :, None]
    lemma = x[:, 2, 0, 0]

    def run(xseq, wih, whh, bih, bhh):
        Bn = xseq.shape[0]
        h = jnp.zeros((Bn, H), jnp.float32)
        c = jnp.zeros((Bn, H), jnp.float32)
        for t in range(T):
            ga = xseq[:, t] @ wih.T + bih + h @ whh.T + bhh
            i = jax.nn.sigmoid(ga[:, 0:H])
            f = jax.nn.sigmoid(ga[:, H:2 * H])
            g = jnp.tanh(ga[:, 2 * H:3 * H])
            o = jax.nn.sigmoid(ga[:, 3 * H:4 * H])
            c = f * c + i * g
            h = o * jnp.tanh(c)
        return h

    hf = run(xf, raw["wih_f"], raw["whh_f"], raw["bih_f"], raw["bhh_f"])
    hb = run(xb, raw["wih_b"], raw["whh_b"], raw["bih_b"], raw["bhh_b"])
    inp = jnp.concatenate([hf, hb, lemma[:, None]], axis=1)
    y = inp * raw["bn1_s"][None] + raw["bn1_t"][None]
    y = y @ raw["w1"].T + raw["b1"][None]
    y = jnp.maximum(y, 0.0)
    y = y * raw["bn2_s"][None] + raw["bn2_t"][None]
    logits = y @ raw["w2"].T + raw["b2"][None]
    return jax.nn.softmax(logits, axis=1)


if __name__ == "__main__":
    key = jax.random.PRNGKey(0)
    kx, kp = jax.random.split(key)

    B = 4
    x = jax.random.normal(kx, (B, 3, T, F), jnp.float32)
    raw = init_params(kp)
    kparams = pack_params(raw)

    out = lstm_model_forward(x, kparams)
    out = jax.block_until_ready(out)

    assert out.shape == (B, NCLS)
    row_sums = jnp.sum(out, axis=1)
    assert bool(jnp.all(jnp.abs(row_sums - 1.0) < 1e-3)), row_sums

    ref = reference_forward(x, raw)
    max_err = float(jnp.max(jnp.abs(out - ref)))
    assert max_err < 2e-2, f"max abs err vs reference: {max_err}"

    print("KERNEL_OK")
</pallas_src>

<mosaic_0001>
module attributes {stable_mosaic.version = 11 : i64} {
  func.func @fused_lstm_head_kernel(%arg0: i32, %arg1: memref<11x8x32xbf16, #tpu.memory_space<vmem>>, %arg2: memref<8x1xf32, #tpu.memory_space<vmem>>, %arg3: memref<32x256xbf16, #tpu.memory_space<vmem>>, %arg4: memref<64x256xbf16, #tpu.memory_space<vmem>>, %arg5: memref<24x256xf32, #tpu.memory_space<vmem>>, %arg6: memref<64x128xbf16, #tpu.memory_space<vmem>>, %arg7: memref<128x128xbf16, #tpu.memory_space<vmem>>, %arg8: memref<8x128xf32, #tpu.memory_space<vmem>>, %arg9: memref<8x128xf32, #tpu.memory_space<vmem>>, %arg10: memref<11x8x256xf32, #tpu.memory_space<vmem>>) attributes {dimension_semantics = [#tpu.dimension_semantics<parallel>], iteration_bounds = array<i64: 1>, scalar_prefetch = 0 : i64, scratch_operands = 1 : i64, tpu.core_type = #tpu.core_type<tc>, window_params = [{transform_indices = @transform_0, window_bounds = array<i64: 11, 8, 32>}, {transform_indices = @transform_1, window_bounds = array<i64: 8, 1>}, {pipeline_mode = #tpu.pipeline_mode<synchronous>, transform_indices = @transform_2, window_bounds = array<i64: 32, 256>}, {pipeline_mode = #tpu.pipeline_mode<synchronous>, transform_indices = @transform_3, window_bounds = array<i64: 64, 256>}, {pipeline_mode = #tpu.pipeline_mode<synchronous>, transform_indices = @transform_4, window_bounds = array<i64: 24, 256>}, {pipeline_mode = #tpu.pipeline_mode<synchronous>, transform_indices = @transform_5, window_bounds = array<i64: 64, 128>}, {pipeline_mode = #tpu.pipeline_mode<synchronous>, transform_indices = @transform_6, window_bounds = array<i64: 128, 128>}, {pipeline_mode = #tpu.pipeline_mode<synchronous>, transform_indices = @transform_7, window_bounds = array<i64: 8, 128>}, {transform_indices = @transform_8, window_bounds = array<i64: 8, 128>}]} {
    %c0 = arith.constant 0 : index
    %c0_0 = arith.constant 0 : index
    %0 = vector.load %arg5[%c0, %c0_0] : memref<24x256xf32, #tpu.memory_space<vmem>>, vector<24x256xf32>
    %1 = vector.extract_strided_slice %0 {offsets = [0, 0], sizes = [11, 256], strides = [1, 1]} : vector<24x256xf32> to vector<11x256xf32>
    %2 = vector.extract_strided_slice %0 {offsets = [11, 0], sizes = [11, 256], strides = [1, 1]} : vector<24x256xf32> to vector<11x256xf32>
    %3 = vector.extract_strided_slice %0 {offsets = [22, 0], sizes = [1, 256], strides = [1, 1]} : vector<24x256xf32> to vector<1x256xf32>
    %4 = vector.extract_strided_slice %0 {offsets = [23, 0], sizes = [1, 256], strides = [1, 1]} : vector<24x256xf32> to vector<1x256xf32>
    %c0_1 = arith.constant 0 : index
    %c0_2 = arith.constant 0 : index
    %c0_3 = arith.constant 0 : index
    %5 = vector.load %arg1[%c0_1, %c0_2, %c0_3] : memref<11x8x32xbf16, #tpu.memory_space<vmem>>, vector<11x8x32xbf16>
    %6 = vector.shape_cast %5 : vector<11x8x32xbf16> to vector<88x32xbf16>
    %c0_4 = arith.constant 0 : index
    %c0_5 = arith.constant 0 : index
    %7 = vector.load %arg3[%c0_4, %c0_5] : memref<32x256xbf16, #tpu.memory_space<vmem>>, vector<32x256xbf16>
    %cst = arith.constant dense<0.000000e+00> : vector<88x256xf32>
    %8 = tpu.matmul %6, %7, %cst {dimension_numbers = #tpu.dot_dimension_numbers<[1], [0], [0], [1], [0, 0, 1, 1], [], []>} : vector<88x32xbf16>, vector<32x256xbf16>, vector<88x256xf32> -> vector<88x256xf32>
    %9 = vector.shape_cast %8 : vector<88x256xf32> to vector<11x8x256xf32>
    %10 = vector.shape_cast %1 : vector<11x256xf32> to vector<11x1x256xf32>
    %11 = vector.broadcast %10 : vector<11x1x256xf32> to vector<11x8x256xf32>
    %12 = arith.mulf %9, %11 : vector<11x8x256xf32>
    %13 = vector.shape_cast %2 : vector<11x256xf32> to vector<11x1x256xf32>
    %14 = vector.broadcast %13 : vector<11x1x256xf32> to vector<11x8x256xf32>
    %15 = arith.addf %12, %14 : vector<11x8x256xf32>
    %c0_6 = arith.constant 0 : index
    %c0_7 = arith.constant 0 : index
    %c0_8 = arith.constant 0 : index
    %16 = vector.load %arg10[%c0_6, %c0_7, %c0_8] : memref<11x8x256xf32, #tpu.memory_space<vmem>>, vector<11x8x256xf32>
    tpu.vector_store %arg10[%c0_6, %c0_7, %c0_8], %15 {strides = array<i32>} : memref<11x8x256xf32, #tpu.memory_space<vmem>>, vector<11x8x256xf32>,
    %c0_9 = arith.constant 0 : index
    %c0_10 = arith.constant 0 : index
    %17 = vector.load %arg4[%c0_9, %c0_10] : memref<64x256xbf16, #tpu.memory_space<vmem>>, vector<64x256xbf16>
    %cst_11 = arith.constant 0.000000e+00 : f32
    %18 = vector.broadcast %cst_11 : f32 to vector<8x64xf32>
    %cst_12 = arith.constant 0.000000e+00 : f32
    %19 = vector.broadcast %cst_12 : f32 to vector<8x64xf32>
    %c0_i32 = arith.constant 0 : i32
    %20 = arith.truncf %18 : vector<8x64xf32> to vector<8x64xbf16>
    %cst_13 = arith.constant dense<0.000000e+00> : vector<8x256xf32>
    %21 = tpu.matmul %20, %17, %cst_13 {dimension_numbers = #tpu.dot_dimension_numbers<[1], [0], [0], [1], [0, 0, 1, 1], [], []>} : vector<8x64xbf16>, vector<64x256xbf16>, vector<8x256xf32> -> vector<8x256xf32>
    %22 = arith.index_cast %c0_i32 : i32 to index
    %c0_14 = arith.constant 0 : index
    %c0_15 = arith.constant 0 : index
    %23 = vector.load %arg10[%22, %c0_14, %c0_15] : memref<11x8x256xf32, #tpu.memory_space<vmem>>, vector<1x8x256xf32>
    %24 = vector.shape_cast %23 : vector<1x8x256xf32> to vector<8x256xf32>
    %25 = arith.addf %24, %21 : vector<8x256xf32>
    %26 = math.tanh %25 : vector<8x256xf32>
    %27 = vector.broadcast %3 : vector<1x256xf32> to vector<8x256xf32>
    %28 = arith.mulf %26, %27 : vector<8x256xf32>
    %29 = vector.broadcast %4 : vector<1x256xf32> to vector<8x256xf32>
    %30 = arith.addf %28, %29 : vector<8x256xf32>
    %31 = vector.extract_strided_slice %30 {offsets = [0, 0], sizes = [8, 64], strides = [1, 1]} : vector<8x256xf32> to vector<8x64xf32>
    %32 = vector.extract_strided_slice %30 {offsets = [0, 64], sizes = [8, 64], strides = [1, 1]} : vector<8x256xf32> to vector<8x64xf32>
    %33 = vector.extract_strided_slice %30 {offsets = [0, 128], sizes = [8, 64], strides = [1, 1]} : vector<8x256xf32> to vector<8x64xf32>
    %34 = vector.extract_strided_slice %30 {offsets = [0, 192], sizes = [8, 64], strides = [1, 1]} : vector<8x256xf32> to vector<8x64xf32>
    %35 = arith.mulf %32, %19 : vector<8x64xf32>
    %36 = arith.mulf %31, %33 : vector<8x64xf32>
    %37 = arith.addf %35, %36 : vector<8x64xf32>
    %38 = math.tanh %37 : vector<8x64xf32>
    %39 = arith.mulf %34, %38 : vector<8x64xf32>
    %c1_i32 = arith.constant 1 : i32
    %40 = arith.truncf %39 : vector<8x64xf32> to vector<8x64xbf16>
    %cst_16 = arith.constant dense<0.000000e+00> : vector<8x256xf32>
    %41 = tpu.matmul %40, %17, %cst_16 {dimension_numbers = #tpu.dot_dimension_numbers<[1], [0], [0], [1], [0, 0, 1, 1], [], []>} : vector<8x64xbf16>, vector<64x256xbf16>, vector<8x256xf32> -> vector<8x256xf32>
    %42 = arith.index_cast %c1_i32 : i32 to index
    %c0_17 = arith.constant 0 : index
    %c0_18 = arith.constant 0 : index
    %43 = vector.load %arg10[%42, %c0_17, %c0_18] : memref<11x8x256xf32, #tpu.memory_space<vmem>>, vector<1x8x256xf32>
    %44 = vector.shape_cast %43 : vector<1x8x256xf32> to vector<8x256xf32>
    %45 = arith.addf %44, %41 : vector<8x256xf32>
    %46 = math.tanh %45 : vector<8x256xf32>
    %47 = vector.broadcast %3 : vector<1x256xf32> to vector<8x256xf32>
    %48 = arith.mulf %46, %47 : vector<8x256xf32>
    %49 = vector.broadcast %4 : vector<1x256xf32> to vector<8x256xf32>
    %50 = arith.addf %48, %49 : vector<8x256xf32>
    %51 = vector.extract_strided_slice %50 {offsets = [0, 0], sizes = [8, 64], strides = [1, 1]} : vector<8x256xf32> to vector<8x64xf32>
    %52 = vector.extract_strided_slice %50 {offsets = [0, 64], sizes = [8, 64], strides = [1, 1]} : vector<8x256xf32> to vector<8x64xf32>
    %53 = vector.extract_strided_slice %50 {offsets = [0, 128], sizes = [8, 64], strides = [1, 1]} : vector<8x256xf32> to vector<8x64xf32>
    %54 = vector.extract_strided_slice %50 {offsets = [0, 192], sizes = [8, 64], strides = [1, 1]} : vector<8x256xf32> to vector<8x64xf32>
    %55 = arith.mulf %52, %37 : vector<8x64xf32>
    %56 = arith.mulf %51, %53 : vector<8x64xf32>
    %57 = arith.addf %55, %56 : vector<8x64xf32>
    %58 = math.tanh %57 : vector<8x64xf32>
    %59 = arith.mulf %54, %58 : vector<8x64xf32>
    %c2_i32 = arith.constant 2 : i32
    %60 = arith.truncf %59 : vector<8x64xf32> to vector<8x64xbf16>
    %cst_19 = arith.constant dense<0.000000e+00> : vector<8x256xf32>
    %61 = tpu.matmul %60, %17, %cst_19 {dimension_numbers = #tpu.dot_dimension_numbers<[1], [0], [0], [1], [0, 0, 1, 1], [], []>} : vector<8x64xbf16>, vector<64x256xbf16>, vector<8x256xf32> -> vector<8x256xf32>
    %62 = arith.index_cast %c2_i32 : i32 to index
    %c0_20 = arith.constant 0 : index
    %c0_21 = arith.constant 0 : index
    %63 = vector.load %arg10[%62, %c0_20, %c0_21] : memref<11x8x256xf32, #tpu.memory_space<vmem>>, vector<1x8x256xf32>
    %64 = vector.shape_cast %63 : vector<1x8x256xf32> to vector<8x256xf32>
    %65 = arith.addf %64, %61 : vector<8x256xf32>
    %66 = math.tanh %65 : vector<8x256xf32>
    %67 = vector.broadcast %3 : vector<1x256xf32> to vector<8x256xf32>
    %68 = arith.mulf %66, %67 : vector<8x256xf32>
    %69 = vector.broadcast %4 : vector<1x256xf32> to vector<8x256xf32>
    %70 = arith.addf %68, %69 : vector<8x256xf32>
    %71 = vector.extract_strided_slice %70 {offsets = [0, 0], sizes = [8, 64], strides = [1, 1]} : vector<8x256xf32> to vector<8x64xf32>
    %72 = vector.extract_strided_slice %70 {offsets = [0, 64], sizes = [8, 64], strides = [1, 1]} : vector<8x256xf32> to vector<8x64xf32>
    %73 = vector.extract_strided_slice %70 {offsets = [0, 128], sizes = [8, 64], strides = [1, 1]} : vector<8x256xf32> to vector<8x64xf32>
    %74 = vector.extract_strided_slice %70 {offsets = [0, 192], sizes = [8, 64], strides = [1, 1]} : vector<8x256xf32> to vector<8x64xf32>
    %75 = arith.mulf %72, %57 : vector<8x64xf32>
    %76 = arith.mulf %71, %73 : vector<8x64xf32>
    %77 = arith.addf %75, %76 : vector<8x64xf32>
    %78 = math.tanh %77 : vector<8x64xf32>
    %79 = arith.mulf %74, %78 : vector<8x64xf32>
    %c3_i32 = arith.constant 3 : i32
    %80 = arith.truncf %79 : vector<8x64xf32> to vector<8x64xbf16>
    %cst_22 = arith.constant dense<0.000000e+00> : vector<8x256xf32>
    %81 = tpu.matmul %80, %17, %cst_22 {dimension_numbers = #tpu.dot_dimension_numbers<[1], [0], [0], [1], [0, 0, 1, 1], [], []>} : vector<8x64xbf16>, vector<64x256xbf16>, vector<8x256xf32> -> vector<8x256xf32>
    %82 = arith.index_cast %c3_i32 : i32 to index
    %c0_23 = arith.constant 0 : index
    %c0_24 = arith.constant 0 : index
    %83 = vector.load %arg10[%82, %c0_23, %c0_24] : memref<11x8x256xf32, #tpu.memory_space<vmem>>, vector<1x8x256xf32>
    %84 = vector.shape_cast %83 : vector<1x8x256xf32> to vector<8x256xf32>
    %85 = arith.addf %84, %81 : vector<8x256xf32>
    %86 = math.tanh %85 : vector<8x256xf32>
    %87 = vector.broadcast %3 : vector<1x256xf32> to vector<8x256xf32>
    %88 = arith.mulf %86, %87 : vector<8x256xf32>
    %89 = vector.broadcast %4 : vector<1x256xf32> to vector<8x256xf32>
    %90 = arith.addf %88, %89 : vector<8x256xf32>
    %91 = vector.extract_strided_slice %90 {offsets = [0, 0], sizes = [8, 64], strides = [1, 1]} : vector<8x256xf32> to vector<8x64xf32>
    %92 = vector.extract_strided_slice %90 {offsets = [0, 64], sizes = [8, 64], strides = [1, 1]} : vector<8x256xf32> to vector<8x64xf32>
    %93 = vector.extract_strided_slice %90 {offsets = [0, 128], sizes = [8, 64], strides = [1, 1]} : vector<8x256xf32> to vector<8x64xf32>
    %94 = vector.extract_strided_slice %90 {offsets = [0, 192], sizes = [8, 64], strides = [1, 1]} : vector<8x256xf32> to vector<8x64xf32>
    %95 = arith.mulf %92, %77 : vector<8x64xf32>
    %96 = arith.mulf %91, %93 : vector<8x64xf32>
    %97 = arith.addf %95, %96 : vector<8x64xf32>
    %98 = math.tanh %97 : vector<8x64xf32>
    %99 = arith.mulf %94, %98 : vector<8x64xf32>
    %c4_i32 = arith.constant 4 : i32
    %100 = arith.truncf %99 : vector<8x64xf32> to vector<8x64xbf16>
    %cst_25 = arith.constant dense<0.000000e+00> : vector<8x256xf32>
    %101 = tpu.matmul %100, %17, %cst_25 {dimension_numbers = #tpu.dot_dimension_numbers<[1], [0], [0], [1], [0, 0, 1, 1], [], []>} : vector<8x64xbf16>, vector<64x256xbf16>, vector<8x256xf32> -> vector<8x256xf32>
    %102 = arith.index_cast %c4_i32 : i32 to index
    %c0_26 = arith.constant 0 : index
    %c0_27 = arith.constant 0 : index
    %103 = vector.load %arg10[%102, %c0_26, %c0_27] : memref<11x8x256xf32, #tpu.memory_space<vmem>>, vector<1x8x256xf32>
    %104 = vector.shape_cast %103 : vector<1x8x256xf32> to vector<8x256xf32>
    %105 = arith.addf %104, %101 : vector<8x256xf32>
    %106 = math.tanh %105 : vector<8x256xf32>
    %107 = vector.broadcast %3 : vector<1x256xf32> to vector<8x256xf32>
    %108 = arith.mulf %106, %107 : vector<8x256xf32>
    %109 = vector.broadcast %4 : vector<1x256xf32> to vector<8x256xf32>
    %110 = arith.addf %108, %109 : vector<8x256xf32>
    %111 = vector.extract_strided_slice %110 {offsets = [0, 0], sizes = [8, 64], strides = [1, 1]} : vector<8x256xf32> to vector<8x64xf32>
    %112 = vector.extract_strided_slice %110 {offsets = [0, 64], sizes = [8, 64], strides = [1, 1]} : vector<8x256xf32> to vector<8x64xf32>
    %113 = vector.extract_strided_slice %110 {offsets = [0, 128], sizes = [8, 64], strides = [1, 1]} : vector<8x256xf32> to vector<8x64xf32>
    %114 = vector.extract_strided_slice %110 {offsets = [0, 192], sizes = [8, 64], strides = [1, 1]} : vector<8x256xf32> to vector<8x64xf32>
    %115 = arith.mulf %112, %97 : vector<8x64xf32>
    %116 = arith.mulf %111, %113 : vector<8x64xf32>
    %117 = arith.addf %115, %116 : vector<8x64xf32>
    %118 = math.tanh %117 : vector<8x64xf32>
    %119 = arith.mulf %114, %118 : vector<8x64xf32>
    %c5_i32 = arith.constant 5 : i32
    %120 = arith.truncf %119 : vector<8x64xf32> to vector<8x64xbf16>
    %cst_28 = arith.constant dense<0.000000e+00> : vector<8x256xf32>
    %121 = tpu.matmul %120, %17, %cst_28 {dimension_numbers = #tpu.dot_dimension_numbers<[1], [0], [0], [1], [0, 0, 1, 1], [], []>} : vector<8x64xbf16>, vector<64x256xbf16>, vector<8x256xf32> -> vector<8x256xf32>
    %122 = arith.index_cast %c5_i32 : i32 to index
    %c0_29 = arith.constant 0 : index
    %c0_30 = arith.constant 0 : index
    %123 = vector.load %arg10[%122, %c0_29, %c0_30] : memref<11x8x256xf32, #tpu.memory_space<vmem>>, vector<1x8x256xf32>
    %124 = vector.shape_cast %123 : vector<1x8x256xf32> to vector<8x256xf32>
    %125 = arith.addf %124, %121 : vector<8x256xf32>
    %126 = math.tanh %125 : vector<8x256xf32>
    %127 = vector.broadcast %3 : vector<1x256xf32> to vector<8x256xf32>
    %128 = arith.mulf %126, %127 : vector<8x256xf32>
    %129 = vector.broadcast %4 : vector<1x256xf32> to vector<8x256xf32>
    %130 = arith.addf %128, %129 : vector<8x256xf32>
    %131 = vector.extract_strided_slice %130 {offsets = [0, 0], sizes = [8, 64], strides = [1, 1]} : vector<8x256xf32> to vector<8x64xf32>
    %132 = vector.extract_strided_slice %130 {offsets = [0, 64], sizes = [8, 64], strides = [1, 1]} : vector<8x256xf32> to vector<8x64xf32>
    %133 = vector.extract_strided_slice %130 {offsets = [0, 128], sizes = [8, 64], strides = [1, 1]} : vector<8x256xf32> to vector<8x64xf32>
    %134 = vector.extract_strided_slice %130 {offsets = [0, 192], sizes = [8, 64], strides = [1, 1]} : vector<8x256xf32> to vector<8x64xf32>
    %135 = arith.mulf %132, %117 : vector<8x64xf32>
    %136 = arith.mulf %131, %133 : vector<8x64xf32>
    %137 = arith.addf %135, %136 : vector<8x64xf32>
    %138 = math.tanh %137 : vector<8x64xf32>
    %139 = arith.mulf %134, %138 : vector<8x64xf32>
    %c6_i32 = arith.constant 6 : i32
    %140 = arith.truncf %139 : vector<8x64xf32> to vector<8x64xbf16>
    %cst_31 = arith.constant dense<0.000000e+00> : vector<8x256xf32>
    %141 = tpu.matmul %140, %17, %cst_31 {dimension_numbers = #tpu.dot_dimension_numbers<[1], [0], [0], [1], [0, 0, 1, 1], [], []>} : vector<8x64xbf16>, vector<64x256xbf16>, vector<8x256xf32> -> vector<8x256xf32>
    %142 = arith.index_cast %c6_i32 : i32 to index
    %c0_32 = arith.constant 0 : index
    %c0_33 = arith.constant 0 : index
    %143 = vector.load %arg10[%142, %c0_32, %c0_33] : memref<11x8x256xf32, #tpu.memory_space<vmem>>, vector<1x8x256xf32>
    %144 = vector.shape_cast %143 : vector<1x8x256xf32> to vector<8x256xf32>
    %145 = arith.addf %144, %141 : vector<8x256xf32>
    %146 = math.tanh %145 : vector<8x256xf32>
    %147 = vector.broadcast %3 : vector<1x256xf32> to vector<8x256xf32>
    %148 = arith.mulf %146, %147 : vector<8x256xf32>
    %149 = vector.broadcast %4 : vector<1x256xf32> to vector<8x256xf32>
    %150 = arith.addf %148, %149 : vector<8x256xf32>
    %151 = vector.extract_strided_slice %150 {offsets = [0, 0], sizes = [8, 64], strides = [1, 1]} : vector<8x256xf32> to vector<8x64xf32>
    %152 = vector.extract_strided_slice %150 {offsets = [0, 64], sizes = [8, 64], strides = [1, 1]} : vector<8x256xf32> to vector<8x64xf32>
    %153 = vector.extract_strided_slice %150 {offsets = [0, 128], sizes = [8, 64], strides = [1, 1]} : vector<8x256xf32> to vector<8x64xf32>
    %154 = vector.extract_strided_slice %150 {offsets = [0, 192], sizes = [8, 64], strides = [1, 1]} : vector<8x256xf32> to vector<8x64xf32>
    %155 = arith.mulf %152, %137 : vector<8x64xf32>
    %156 = arith.mulf %151, %153 : vector<8x64xf32>
    %157 = arith.addf %155, %156 : vector<8x64xf32>
    %158 = math.tanh %157 : vector<8x64xf32>
    %159 = arith.mulf %154, %158 : vector<8x64xf32>
    %c7_i32 = arith.constant 7 : i32
    %160 = arith.truncf %159 : vector<8x64xf32> to vector<8x64xbf16>
    %cst_34 = arith.constant dense<0.000000e+00> : vector<8x256xf32>
    %161 = tpu.matmul %160, %17, %cst_34 {dimension_numbers = #tpu.dot_dimension_numbers<[1], [0], [0], [1], [0, 0, 1, 1], [], []>} : vector<8x64xbf16>, vector<64x256xbf16>, vector<8x256xf32> -> vector<8x256xf32>
    %162 = arith.index_cast %c7_i32 : i32 to index
    %c0_35 = arith.constant 0 : index
    %c0_36 = arith.constant 0 : index
    %163 = vector.load %arg10[%162, %c0_35, %c0_36] : memref<11x8x256xf32, #tpu.memory_space<vmem>>, vector<1x8x256xf32>
    %164 = vector.shape_cast %163 : vector<1x8x256xf32> to vector<8x256xf32>
    %165 = arith.addf %164, %161 : vector<8x256xf32>
    %166 = math.tanh %165 : vector<8x256xf32>
    %167 = vector.broadcast %3 : vector<1x256xf32> to vector<8x256xf32>
    %168 = arith.mulf %166, %167 : vector<8x256xf32>
    %169 = vector.broadcast %4 : vector<1x256xf32> to vector<8x256xf32>
    %170 = arith.addf %168, %169 : vector<8x256xf32>
    %171 = vector.extract_strided_slice %170 {offsets = [0, 0], sizes = [8, 64], strides = [1, 1]} : vector<8x256xf32> to vector<8x64xf32>
    %172 = vector.extract_strided_slice %170 {offsets = [0, 64], sizes = [8, 64], strides = [1, 1]} : vector<8x256xf32> to vector<8x64xf32>
    %173 = vector.extract_strided_slice %170 {offsets = [0, 128], sizes = [8, 64], strides = [1, 1]} : vector<8x256xf32> to vector<8x64xf32>
    %174 = vector.extract_strided_slice %170 {offsets = [0, 192], sizes = [8, 64], strides = [1, 1]} : vector<8x256xf32> to vector<8x64xf32>
    %175 = arith.mulf %172, %157 : vector<8x64xf32>
    %176 = arith.mulf %171, %173 : vector<8x64xf32>
    %177 = arith.addf %175, %176 : vector<8x64xf32>
    %178 = math.tanh %177 : vector<8x64xf32>
    %179 = arith.mulf %174, %178 : vector<8x64xf32>
    %c8_i32 = arith.constant 8 : i32
    %180 = arith.truncf %179 : vector<8x64xf32> to vector<8x64xbf16>
    %cst_37 = arith.constant dense<0.000000e+00> : vector<8x256xf32>
    %181 = tpu.matmul %180, %17, %cst_37 {dimension_numbers = #tpu.dot_dimension_numbers<[1], [0], [0], [1], [0, 0, 1, 1], [], []>} : vector<8x64xbf16>, vector<64x256xbf16>, vector<8x256xf32> -> vector<8x256xf32>
    %182 = arith.index_cast %c8_i32 : i32 to index
    %c0_38 = arith.constant 0 : index
    %c0_39 = arith.constant 0 : index
    %183 = vector.load %arg10[%182, %c0_38, %c0_39] : memref<11x8x256xf32, #tpu.memory_space<vmem>>, vector<1x8x256xf32>
    %184 = vector.shape_cast %183 : vector<1x8x256xf32> to vector<8x256xf32>
    %185 = arith.addf %184, %181 : vector<8x256xf32>
    %186 = math.tanh %185 : vector<8x256xf32>
    %187 = vector.broadcast %3 : vector<1x256xf32> to vector<8x256xf32>
    %188 = arith.mulf %186, %187 : vector<8x256xf32>
    %189 = vector.broadcast %4 : vector<1x256xf32> to vector<8x256xf32>
    %190 = arith.addf %188, %189 : vector<8x256xf32>
    %191 = vector.extract_strided_slice %190 {offsets = [0, 0], sizes = [8, 64], strides = [1, 1]} : vector<8x256xf32> to vector<8x64xf32>
    %192 = vector.extract_strided_slice %190 {offsets = [0, 64], sizes = [8, 64], strides = [1, 1]} : vector<8x256xf32> to vector<8x64xf32>
    %193 = vector.extract_strided_slice %190 {offsets = [0, 128], sizes = [8, 64], strides = [1, 1]} : vector<8x256xf32> to vector<8x64xf32>
    %194 = vector.extract_strided_slice %190 {offsets = [0, 192], sizes = [8, 64], strides = [1, 1]} : vector<8x256xf32> to vector<8x64xf32>
    %195 = arith.mulf %192, %177 : vector<8x64xf32>
    %196 = arith.mulf %191, %193 : vector<8x64xf32>
    %197 = arith.addf %195, %196 : vector<8x64xf32>
    %198 = math.tanh %197 : vector<8x64xf32>
    %199 = arith.mulf %194, %198 : vector<8x64xf32>
    %c9_i32 = arith.constant 9 : i32
    %200 = arith.truncf %199 : vector<8x64xf32> to vector<8x64xbf16>
    %cst_40 = arith.constant dense<0.000000e+00> : vector<8x256xf32>
    %201 = tpu.matmul %200, %17, %cst_40 {dimension_numbers = #tpu.dot_dimension_numbers<[1], [0], [0], [1], [0, 0, 1, 1], [], []>} : vector<8x64xbf16>, vector<64x256xbf16>, vector<8x256xf32> -> vector<8x256xf32>
    %202 = arith.index_cast %c9_i32 : i32 to index
    %c0_41 = arith.constant 0 : index
    %c0_42 = arith.constant 0 : index
    %203 = vector.load %arg10[%202, %c0_41, %c0_42] : memref<11x8x256xf32, #tpu.memory_space<vmem>>, vector<1x8x256xf32>
    %204 = vector.shape_cast %203 : vector<1x8x256xf32> to vector<8x256xf32>
    %205 = arith.addf %204, %201 : vector<8x256xf32>
    %206 = math.tanh %205 : vector<8x256xf32>
    %207 = vector.broadcast %3 : vector<1x256xf32> to vector<8x256xf32>
    %208 = arith.mulf %206, %207 : vector<8x256xf32>
    %209 = vector.broadcast %4 : vector<1x256xf32> to vector<8x256xf32>
    %210 = arith.addf %208, %209 : vector<8x256xf32>
    %211 = vector.extract_strided_slice %210 {offsets = [0, 0], sizes = [8, 64], strides = [1, 1]} : vector<8x256xf32> to vector<8x64xf32>
    %212 = vector.extract_strided_slice %210 {offsets = [0, 64], sizes = [8, 64], strides = [1, 1]} : vector<8x256xf32> to vector<8x64xf32>
    %213 = vector.extract_strided_slice %210 {offsets = [0, 128], sizes = [8, 64], strides = [1, 1]} : vector<8x256xf32> to vector<8x64xf32>
    %214 = vector.extract_strided_slice %210 {offsets = [0, 192], sizes = [8, 64], strides = [1, 1]} : vector<8x256xf32> to vector<8x64xf32>
    %215 = arith.mulf %212, %197 : vector<8x64xf32>
    %216 = arith.mulf %211, %213 : vector<8x64xf32>
    %217 = arith.addf %215, %216 : vector<8x64xf32>
    %218 = math.tanh %217 : vector<8x64xf32>
    %219 = arith.mulf %214, %218 : vector<8x64xf32>
    %c10_i32 = arith.constant 10 : i32
    %220 = arith.truncf %219 : vector<8x64xf32> to vector<8x64xbf16>
    %cst_43 = arith.constant dense<0.000000e+00> : vector<8x256xf32>
    %221 = tpu.matmul %220, %17, %cst_43 {dimension_numbers = #tpu.dot_dimension_numbers<[1], [0], [0], [1], [0, 0, 1, 1], [], []>} : vector<8x64xbf16>, vector<64x256xbf16>, vector<8x256xf32> -> vector<8x256xf32>
    %222 = arith.index_cast %c10_i32 : i32 to index
    %c0_44 = arith.constant 0 : index
    %c0_45 = arith.constant 0 : index
    %223 = vector.load %arg10[%222, %c0_44, %c0_45] : memref<11x8x256xf32, #tpu.memory_space<vmem>>, vector<1x8x256xf32>
    %224 = vector.shape_cast %223 : vector<1x8x256xf32> to vector<8x256xf32>
    %225 = arith.addf %224, %221 : vector<8x256xf32>
    %226 = math.tanh %225 : vector<8x256xf32>
    %227 = vector.broadcast %3 : vector<1x256xf32> to vector<8x256xf32>
    %228 = arith.mulf %226, %227 : vector<8x256xf32>
    %229 = vector.broadcast %4 : vector<1x256xf32> to vector<8x256xf32>
    %230 = arith.addf %228, %229 : vector<8x256xf32>
    %231 = vector.extract_strided_slice %230 {offsets = [0, 0], sizes = [8, 64], strides = [1, 1]} : vector<8x256xf32> to vector<8x64xf32>
    %232 = vector.extract_strided_slice %230 {offsets = [0, 64], sizes = [8, 64], strides = [1, 1]} : vector<8x256xf32> to vector<8x64xf32>
    %233 = vector.extract_strided_slice %230 {offsets = [0, 128], sizes = [8, 64], strides = [1, 1]} : vector<8x256xf32> to vector<8x64xf32>
    %234 = vector.extract_strided_slice %230 {offsets = [0, 192], sizes = [8, 64], strides = [1, 1]} : vector<8x256xf32> to vector<8x64xf32>
    %235 = arith.mulf %232, %217 : vector<8x64xf32>
    %236 = arith.mulf %231, %233 : vector<8x64xf32>
    %237 = arith.addf %235, %236 : vector<8x64xf32>
    %238 = math.tanh %237 : vector<8x64xf32>
    %239 = arith.mulf %234, %238 : vector<8x64xf32>
    %c11_i32 = arith.constant 11 : i32
    %c0_46 = arith.constant 0 : index
    %c0_47 = arith.constant 0 : index
    %240 = vector.load %arg8[%c0_46, %c0_47] : memref<8x128xf32, #tpu.memory_space<vmem>>, vector<8x128xf32>
    %241 = vector.extract_strided_slice %240 {offsets = [0, 0], sizes = [1, 128], strides = [1, 1]} : vector<8x128xf32> to vector<1x128xf32>
    %242 = vector.extract_strided_slice %240 {offsets = [1, 0], sizes = [1, 128], strides = [1, 1]} : vector<8x128xf32> to vector<1x128xf32>
    %243 = vector.extract_strided_slice %240 {offsets = [2, 0], sizes = [1, 128], strides = [1, 1]} : vector<8x128xf32> to vector<1x128xf32>
    %244 = arith.truncf %239 : vector<8x64xf32> to vector<8x64xbf16>
    %c0_48 = arith.constant 0 : index
    %c0_49 = arith.constant 0 : index
    %245 = vector.load %arg6[%c0_48, %c0_49] : memref<64x128xbf16, #tpu.memory_space<vmem>>, vector<64x128xbf16>
    %cst_50 = arith.constant dense<0.000000e+00> : vector<8x128xf32>
    %246 = tpu.matmul %244, %245, %cst_50 {dimension_numbers = #tpu.dot_dimension_numbers<[1], [0], [0], [1], [0, 0, 1, 1], [], []>} : vector<8x64xbf16>, vector<64x128xbf16>, vector<8x128xf32> -> vector<8x128xf32>
    %c0_51 = arith.constant 0 : index
    %c0_52 = arith.constant 0 : index
    %247 = vector.load %arg2[%c0_51, %c0_52] : memref<8x1xf32, #tpu.memory_space<vmem>>, vector<8x1xf32>
    %248 = vector.broadcast %247 : vector<8x1xf32> to vector<8x128xf32>
    %249 = vector.broadcast %242 : vector<1x128xf32> to vector<8x128xf32>
    %250 = arith.mulf %248, %249 : vector<8x128xf32>
    %251 = arith.addf %246, %250 : vector<8x128xf32>
    %252 = vector.broadcast %241 : vector<1x128xf32> to vector<8x128xf32>
    %253 = arith.addf %251, %252 : vector<8x128xf32>
    %cst_53 = arith.constant 0.000000e+00 : f32
    %254 = vector.broadcast %cst_53 : f32 to vector<8x128xf32>
    %255 = arith.maximumf %253, %254 : vector<8x128xf32>
    %256 = arith.truncf %255 : vector<8x128xf32> to vector<8x128xbf16>
    %c0_54 = arith.constant 0 : index
    %c0_55 = arith.constant 0 : index
    %257 = vector.load %arg7[%c0_54, %c0_55] : memref<128x128xbf16, #tpu.memory_space<vmem>>, vector<128x128xbf16>
    %cst_56 = arith.constant dense<0.000000e+00> : vector<8x128xf32>
    %258 = tpu.matmul %256, %257, %cst_56 {dimension_numbers = #tpu.dot_dimension_numbers<[1], [0], [0], [1], [0, 0, 1, 1], [], []>} : vector<8x128xbf16>, vector<128x128xbf16>, vector<8x128xf32> -> vector<8x128xf32>
    %259 = vector.broadcast %243 : vector<1x128xf32> to vector<8x128xf32>
    %260 = arith.addf %258, %259 : vector<8x128xf32>
    %cst_57 = arith.constant dense<0xFF800000> : vector<8xf32>
    %261 = vector.multi_reduction <maximumf>, %260, %cst_57 [1] : vector<8x128xf32> to vector<8xf32>
    %262 = vector.shape_cast %261 : vector<8xf32> to vector<8x1xf32>
    %263 = vector.broadcast %262 : vector<8x1xf32> to vector<8x128xf32>
    %264 = arith.subf %260, %263 : vector<8x128xf32>
    %265 = math.exp %264 : vector<8x128xf32>
    %cst_58 = arith.constant dense<0.000000e+00> : vector<8xf32>
    %266 = vector.multi_reduction <add>, %265, %cst_58 [1] : vector<8x128xf32> to vector<8xf32>
    %267 = vector.shape_cast %266 : vector<8xf32> to vector<8x1xf32>
    %268 = vector.broadcast %267 : vector<8x1xf32> to vector<8x128xf32>
    %269 = arith.divf %265, %268 : vector<8x128xf32>
    %c0_59 = arith.constant 0 : index
    %c0_60 = arith.constant 0 : index
    %270 = vector.load %arg9[%c0_59, %c0_60] : memref<8x128xf32, #tpu.memory_space<vmem>>, vector<8x128xf32>
    tpu.vector_store %arg9[%c0_59, %c0_60], %269 {strides = array<i32>} : memref<8x128xf32, #tpu.memory_space<vmem>>, vector<8x128xf32>,
    return
  }
  func.func @transform_0(%arg0: i32) -> (i32, i32, i32) {
    %c0_i32 = arith.constant 0 : i32
    %c0_i32_0 = arith.constant 0 : i32
    %c0_i32_1 = arith.constant 0 : i32
    return %c0_i32, %arg0, %c0_i32_0 : i32, i32, i32
  }
  func.func @transform_1(%arg0: i32) -> (i32, i32) {
    %c0_i32 = arith.constant 0 : i32
    %c0_i32_0 = arith.constant 0 : i32
    return %arg0, %c0_i32 : i32, i32
  }
  func.func @transform_2(%arg0: i32) -> (i32, i32) {
    %c0_i32 = arith.constant 0 : i32
    %c0_i32_0 = arith.constant 0 : i32
    %c0_i32_1 = arith.constant 0 : i32
    return %c0_i32, %c0_i32_0 : i32, i32
  }
  func.func @transform_3(%arg0: i32) -> (i32, i32) {
    %c0_i32 = arith.constant 0 : i32
    %c0_i32_0 = arith.constant 0 : i32
    %c0_i32_1 = arith.constant 0 : i32
    return %c0_i32, %c0_i32_0 : i32, i32
  }
  func.func @transform_4(%arg0: i32) -> (i32, i32) {
    %c0_i32 = arith.constant 0 : i32
    %c0_i32_0 = arith.constant 0 : i32
    %c0_i32_1 = arith.constant 0 : i32
    return %c0_i32, %c0_i32_0 : i32, i32
  }
  func.func @transform_5(%arg0: i32) -> (i32, i32) {
    %c0_i32 = arith.constant 0 : i32
    %c0_i32_0 = arith.constant 0 : i32
    %c0_i32_1 = arith.constant 0 : i32
    return %c0_i32, %c0_i32_0 : i32, i32
  }
  func.func @transform_6(%arg0: i32) -> (i32, i32) {
    %c0_i32 = arith.constant 0 : i32
    %c0_i32_0 = arith.constant 0 : i32
    %c0_i32_1 = arith.constant 0 : i32
    return %c0_i32, %c0_i32_0 : i32, i32
  }
  func.func @transform_7(%arg0: i32) -> (i32, i32) {
    %c0_i32 = arith.constant 0 : i32
    %c0_i32_0 = arith.constant 0 : i32
    %c0_i32_1 = arith.constant 0 : i32
    return %c0_i32, %c0_i32_0 : i32, i32
  }
  func.func @transform_8(%arg0: i32) -> (i32, i32) {
    %c0_i32 = arith.constant 0 : i32
    %c0_i32_0 = arith.constant 0 : i32
    return %arg0, %c0_i32 : i32, i32
  }
}

</mosaic_0001>

<llo_original>
// kernel: lstm_model_forward.1
$region0: #{lstm_model_forward.1}
  #allocation0 [shape = 'u32[]', space=smem, size = 0x4, offset = 0x4, fixed_abs, tag = 'smem constant byte address 0x4 - core index']
  #allocation1 [shape = 'u32[144,128]{1,0:T(1,128)}', space=vmem, size = 0x12000, scoped, tag = 'internal scratch']
  #allocation2 [shape = 'f32[11,8,256]{2,1,0:T(8,128)}', space=vmem, size = 0x16000, scoped, tag = 'scratch operand']
  %s0 = inlined_call_operand.vmem [shape: bf16[11,8,32], index: 0, kind: input, shape index: {}]
  %s1 = inlined_call_operand.vmem [shape: f32[8,1], index: 1, kind: input, shape index: {}]
  %s2 = inlined_call_operand.vmem [shape: bf16[32,256], index: 2, kind: input, shape index: {}]
  %s3 = inlined_call_operand.vmem [shape: bf16[64,256], index: 3, kind: input, shape index: {}]
  %s4 = inlined_call_operand.vmem [shape: f32[24,256], index: 4, kind: input, shape index: {}]
  %s5 = inlined_call_operand.vmem [shape: bf16[64,128], index: 5, kind: input, shape index: {}]
  %s6 = inlined_call_operand.vmem [shape: bf16[128,128], index: 6, kind: input, shape index: {}]
  %s7 = inlined_call_operand.vmem [shape: f32[8,128], index: 7, kind: input, shape index: {}]
  %s8 = inlined_call_operand.vmem [shape: f32[8,128], index: 8, kind: output, shape index: {}]
  %s9 = sld [smem:[#allocation0]]
  $region42: #{lstm_model_forward.1} parent=0
    _
  %s11 = ssub.s32 1, %s9
  %s12 = scalar_select 0, %s11, %s9
  // Predicated region
  $region2: #{lstm_model_forward.1} parent=0 // pred_check
    _
  $region3: #{lstm_model_forward.1} parent=0 // pred_check_branch
    %14 = sbr.rel (0) target = $region5
  $region4: #{lstm_model_forward.1} parent=0 // pred_region
    _
  $region5: #{lstm_model_forward.1} parent=0 // pred_fallthru
    _
  // Predicated region
  $region6: #{lstm_model_forward.1} parent=0 // pred_check
    _
  $region7: #{lstm_model_forward.1} parent=0 // pred_check_branch
    %16 = sbr.rel (0) target = $region9
  $region8: #{lstm_model_forward.1} parent=0 // pred_region
    _
  $region9: #{lstm_model_forward.1} parent=0 // pred_fallthru
    _
  // Predicated region
  $region10: #{lstm_model_forward.1} parent=0 // pred_check
    _
  $region11: #{lstm_model_forward.1} parent=0 // pred_check_branch
    %18 = sbr.rel (0) target = $region13
  $region12: #{lstm_model_forward.1} parent=0 // pred_region
    _
  $region13: #{lstm_model_forward.1} parent=0 // pred_fallthru
    _
  // Predicated region
  $region14: #{lstm_model_forward.1} parent=0 // pred_check
    _
  $region15: #{lstm_model_forward.1} parent=0 // pred_check_branch
    %20 = sbr.rel (0) target = $region17
  $region16: #{lstm_model_forward.1} parent=0 // pred_region
    _
  $region17: #{lstm_model_forward.1} parent=0 // pred_fallthru
    _
  // Predicated region
  $region18: #{lstm_model_forward.1} parent=0 // pred_check
    _
  $region19: #{lstm_model_forward.1} parent=0 // pred_check_branch
    %22 = sbr.rel (0) target = $region21
  $region20: #{lstm_model_forward.1} parent=0 // pred_region
    _
  $region21: #{lstm_model_forward.1} parent=0 // pred_fallthru
    _
  // Predicated region
  $region22: #{lstm_model_forward.1} parent=0 // pred_check
    _
  $region23: #{lstm_model_forward.1} parent=0 // pred_check_branch
    %24 = sbr.rel (0) target = $region25
  $region24: #{lstm_model_forward.1} parent=0 // pred_region
    _
  $region25: #{lstm_model_forward.1} parent=0 // pred_fallthru
    _
  // Predicated region
  $region26: #{lstm_model_forward.1} parent=0 // pred_check
    _
  $region27: #{lstm_model_forward.1} parent=0 // pred_check_branch
    %26 = sbr.rel (0) target = $region29
  $region28: #{lstm_model_forward.1} parent=0 // pred_region
    _
  $region29: #{lstm_model_forward.1} parent=0 // pred_fallthru
    _
  // Predicated region
  $region30: #{lstm_model_forward.1} parent=0 // pred_check
    _
  $region31: #{lstm_model_forward.1} parent=0 // pred_check_branch
    %28 = sbr.rel (0) target = $region33
  $region32: #{lstm_model_forward.1} parent=0 // pred_region
    _
  $region33: #{lstm_model_forward.1} parent=0 // pred_fallthru
    _
  %v30 = vld [vmem:[%s4] sm:$0xff]
  %v31 = vld [vmem:[%s4 + $0x8] sm:$0xff]
  %v32 = vld [vmem:[%s4 + $0x10] sm:$0xff]
  %v33 = vld [vmem:[%s4 + $0x18] sm:$0xff]
  %v34 = vld [vmem:[%s4 + $0x20] sm:$0xff]
  %v35 = vld [vmem:[%s4 + $0x28] sm:$0xff]
  %v36 = vld [vmem:[%s0] sm:$0xf]
  %v37 = vld [vmem:[%s0 + $0x4] sm:$0xf]
  %v38 = vld [vmem:[%s0 + $0x8] sm:$0xf]
  %v39 = vld [vmem:[%s0 + $0xc] sm:$0xf]
  %v40 = vld [vmem:[%s0 + $0x10] sm:$0xf]
  %v41 = vld [vmem:[%s0 + $0x14] sm:$0xf]
  %v42 = vld [vmem:[%s0 + $0x18] sm:$0xf]
  %v43 = vld [vmem:[%s0 + $0x1c] sm:$0xf]
  %v44 = vld [vmem:[%s0 + $0x20] sm:$0xf]
  %v45 = vld [vmem:[%s0 + $0x24] sm:$0xf]
  %v46 = vld [vmem:[%s0 + $0x28] sm:$0xf]
  %v47 = vld [vmem:[%s2] sm:$0xff]
  %v48 = vld [vmem:[%s2 + $0x8] sm:$0xff]
  %v49 = vld [vmem:[%s2 + $0x10] sm:$0xff]
  %v50 = vld [vmem:[%s2 + $0x18] sm:$0xff]
  %v62 = vunpack.c.l.b16 %v36
  %v63 = vunpack.c.l.b16 %v37
  %v64 = vunpack.c.l.b16 %v38
  %v65 = vunpack.c.l.b16 %v39
  %v66 = vunpack.c.l.b16 %v40
  %v67 = vunpack.c.l.b16 %v41
  %v68 = vunpack.c.l.b16 %v42
  %v69 = vunpack.c.l.b16 %v43
  %v70 = vunpack.c.l.b16 %v44
  %v71 = vunpack.c.l.b16 %v45
  %v72 = vunpack.c.l.b16 %v46
  %v73 = vpack.c.b16 %v63, %v62
  %v74 = vpack.c.b16 %v65, %v64
  %v75 = vpack.c.b16 %v67, %v66
  %v76 = vpack.c.b16 %v69, %v68
  %v77 = vpack.c.b16 %v71, %v70
  %v78 = vpack.c.b16 %v72, %v72
  %v83 = vunpack.c.l.b16 %v47
  %v84 = vunpack.c.h.b16 %v47
  %v85 = vunpack.c.l.b16 %v48
  %v86 = vunpack.c.h.b16 %v48
  %v87 = vunpack.c.l.b16 %v49
  %v88 = vunpack.c.h.b16 %v49
  %v89 = vunpack.c.l.b16 %v50
  %v90 = vunpack.c.h.b16 %v50
  %v91 = vpack.c.b16 %v85, %v83
  %v92 = vpack.c.b16 %v86, %v84
  %v93 = vpack.c.b16 %v89, %v87
  %v94 = vpack.c.b16 %v90, %v88
  %vm99 = vcmask 261120
  %v101 = vsel %vm99, %v73, 0
  %v104 = vsel %vm99, %v74, 0
  %v107 = vsel %vm99, %v75, 0
  %v110 = vsel %vm99, %v76, 0
  %v113 = vsel %vm99, %v77, 0
  %v116 = vsel %vm99, %v78, 0
  %118 = vmatprep.subr.bf16.mxu0 0
  %119 = vmatpush1.bf16.msra.mxu0 0
  %120 = vmatprep.subr.bf16.mxu0 0
  %121 = vmatpush1.bf16.msra.mxu0 0
  %122 = vmatprep.subr.bf16.mxu0 0
  %123 = vmatpush1.bf16.msra.mxu0 0
  %124 = vmatprep.subr.bf16.mxu0 0
  %125 = vmatpush1.bf16.msra.mxu0 0
  %126 = vmatprep.subr.bf16.mxu0 0
  %127 = vmatpush1.bf16.msra.mxu0 0
  %128 = vmatprep.subr.bf16.mxu0 0
  %129 = vmatpush1.bf16.msra.mxu0 0
  %130 = vmatprep.subr.bf16.mxu0 %v94
  %131 = vmatpush1.bf16.msra.mxu0 %v93
  %132 = vmatprep.subr.bf16.mxu0 %v92
  %133 = vmatpush1.bf16.msra.mxu0 %v91
  %134 = vmatprep.subr.bf16.mxu0 0
  %135 = vmatpush2.bf16.msra.mxu0 0
  %136 = vmatprep.subr.bf16.mxu0 0
  %137 = vmatpush2.bf16.msra.mxu0 0
  %138 = vmatprep.subr.bf16.mxu0 0
  %139 = vmatpush2.bf16.msra.mxu0 0
  %140 = vmatprep.subr.bf16.mxu0 0
  %141 = vmatpush2.bf16.msra.mxu0 0
  %142 = vmatprep.subr.bf16.mxu0 0
  %143 = vmatpush2.bf16.msra.mxu0 0
  %144 = vmatprep.subr.bf16.mxu0 0
  %145 = vmatpush2.bf16.msra.mxu0 0
  %146 = vmatprep.subr.bf16.mxu0 0
  %147 = vmatpush2.bf16.msra.mxu0 0
  %148 = vmatprep.subr.bf16.mxu0 0
  %149 = vmatpush2.bf16.msra.mxu0 0
  %150 = vmatprep.mubr.bf16.mxu0 0
  %151 = vmatmul.mubr.bf16.gmra.mxu0 %v101
  %v152 = vpop.f32.mrf.mxu0
  %v153 = vadd.f32 0.0, %v152
  %v154 = vpop.f32.mrf.mxu0
  %v155 = vadd.f32 0.0, %v154
  %v156 = vpop.f32.mrf.mxu0
  %v157 = vadd.f32 0.0, %v156
  %v158 = vpop.f32.mrf.mxu0
  %v159 = vadd.f32 0.0, %v158
  %160 = vmatprep.mubr.bf16.mxu0 0
  %161 = vmatmul.mubr.bf16.gmra.mxu0 %v104
  %v162 = vpop.f32.mrf.mxu0
  %v163 = vadd.f32 0.0, %v162
  %v164 = vpop.f32.mrf.mxu0
  %v165 = vadd.f32 0.0, %v164
  %v166 = vpop.f32.mrf.mxu0
  %v167 = vadd.f32 0.0, %v166
  %v168 = vpop.f32.mrf.mxu0
  %v169 = vadd.f32 0.0, %v168
  %170 = vmatprep.mubr.bf16.mxu0 0
  %171 = vmatmul.mubr.bf16.gmra.mxu0 %v107
  %v172 = vpop.f32.mrf.mxu0
  %v173 = vadd.f32 0.0, %v172
  %v174 = vpop.f32.mrf.mxu0
  %v175 = vadd.f32 0.0, %v174
  %v176 = vpop.f32.mrf.mxu0
  %v177 = vadd.f32 0.0, %v176
  %v178 = vpop.f32.mrf.mxu0
  %v179 = vadd.f32 0.0, %v178
  %180 = vmatprep.mubr.bf16.mxu0 0
  %181 = vmatmul.mubr.bf16.gmra.mxu0 %v110
  %v182 = vpop.f32.mrf.mxu0
  %v183 = vadd.f32 0.0, %v182
  %v184 = vpop.f32.mrf.mxu0
  %v185 = vadd.f32 0.0, %v184
  %v186 = vpop.f32.mrf.mxu0
  %v187 = vadd.f32 0.0, %v186
  %v188 = vpop.f32.mrf.mxu0
  %v189 = vadd.f32 0.0, %v188
  %190 = vmatprep.mubr.bf16.mxu0 0
  %191 = vmatmul.mubr.bf16.gmra.mxu0 %v113
  %v192 = vpop.f32.mrf.mxu0
  %v193 = vadd.f32 0.0, %v192
  %v194 = vpop.f32.mrf.mxu0
  %v195 = vadd.f32 0.0, %v194
  %v196 = vpop.f32.mrf.mxu0
  %v197 = vadd.f32 0.0, %v196
  %v198 = vpop.f32.mrf.mxu0
  %v199 = vadd.f32 0.0, %v198
  %200 = vmatprep.mubr.bf16.mxu0 0
  %201 = vmatmul.mubr.bf16.gmra.mxu0 %v116
  %v202 = vpop.f32.mrf.mxu0
  %v203 = vadd.f32 0.0, %v202
  %v204 = vpop.f32.mrf.mxu0
  %v205 = vadd.f32 0.0, %v204
  %v206 = vpop.f32.mrf.mxu0
  %v207 = vpop.f32.mrf.mxu0
  %208 = vdwg.mxu0
  %v213 = vcombine.low %v30, %v31
  %v214 = vcombine.high %v30, %v31
  %v216 = vunpack.c.l.s4 1966171168
  %v217 = vunpack.c.0.s8 %v216
  %v218 = vlaneseq
  %v219 = vshrl.u32 %v218, 7
  %v220 = vsub.s32 %v217, %v219
  %v221 = vrot.slane %v213, %v220
  %v223 = vunpack.c.l.s4 1966171168
  %v224 = vunpack.c.0.s8 %v223
  %v225 = vlaneseq
  %v226 = vshrl.u32 %v225, 7
  %v227 = vsub.s32 %v224, %v226
  %v228 = vrot.slane %v214, %v227
  %v229 = vcombine.high %v221, %v221
  %v230 = vcombine.high %v228, %v228
  %v232 = vunpack.c.l.s4 1966171168
  %v233 = vunpack.c.0.s8 %v232
  %v234 = vlaneseq
  %v235 = vshrl.u32 %v234, 7
  %v236 = vsub.s32 %v233, %v235
  %v237 = vrot.slane %v221, %v236
  %v239 = vunpack.c.l.s4 1966171168
  %v240 = vunpack.c.0.s8 %v239
  %v241 = vlaneseq
  %v242 = vshrl.u32 %v241, 7
  %v243 = vsub.s32 %v240, %v242
  %v244 = vrot.slane %v228, %v243
  %v246 = vunpack.c.l.s4 1966171168
  %v247 = vunpack.c.0.s8 %v246
  %v248 = vlaneseq
  %v249 = vshrl.u32 %v248, 7
  %v250 = vsub.s32 %v247, %v249
  %v251 = vrot.slane %v229, %v250
  %v253 = vunpack.c.l.s4 1966171168
  %v254 = vunpack.c.0.s8 %v253
  %v255 = vlaneseq
  %v256 = vshrl.u32 %v255, 7
  %v257 = vsub.s32 %v254, %v256
  %v258 = vrot.slane %v230, %v257
  %v259 = vcombine.high %v237, %v237
  %v260 = vcombine.high %v244, %v244
  %v261 = vcombine.high %v251, %v251
  %v262 = vcombine.high %v258, %v258
  %v263 = vcombine.low %v32, %v33
  %v265 = vunpack.c.l.s4 1966171168
  %v266 = vunpack.c.0.s8 %v265
  %v267 = vlaneseq
  %v268 = vshrl.u32 %v267, 7
  %v269 = vsub.s32 %v266, %v268
  %v270 = vrot.slane %v263, %v269
  %v271 = vcombine.high %v270, %v270
  %v273 = vunpack.c.l.s4 1966171168
  %v274 = vunpack.c.0.s8 %v273
  %v275 = vlaneseq
  %v276 = vshrl.u32 %v275, 7
  %v277 = vsub.s32 %v274, %v276
  %v278 = vrot.slane %v270, %v277
  %v280 = vunpack.c.l.s4 1966171168
  %v281 = vunpack.c.0.s8 %v280
  %v282 = vlaneseq
  %v283 = vshrl.u32 %v282, 7
  %v284 = vsub.s32 %v281, %v283
  %v285 = vrot.slane %v271, %v284
  %v286 = vcombine.high %v278, %v278
  %v287 = vlaneseq
  %v288 = vshrl.u32 %v287, 7
  %v289 = vsub.s32 0, %v288
  %v290 = vrot.slane %v237, %v289
  %v291 = vlaneseq
  %v292 = vshrl.u32 %v291, 7
  %v293 = vsub.s32 1, %v292
  %v294 = vrot.slane %v237, %v293
  %v295 = vlaneseq
  %v296 = vshrl.u32 %v295, 7
  %v297 = vsub.s32 0, %v296
  %v298 = vrot.slane %v251, %v297
  %v299 = vlaneseq
  %v300 = vshrl.u32 %v299, 7
  %v301 = vsub.s32 1, %v300
  %v302 = vrot.slane %v251, %v301
  %v303 = vlaneseq
  %v304 = vshrl.u32 %v303, 7
  %v305 = vsub.s32 0, %v304
  %v306 = vrot.slane %v259, %v305
  %v307 = vlaneseq
  %v308 = vshrl.u32 %v307, 7
  %v309 = vsub.s32 1, %v308
  %v310 = vrot.slane %v259, %v309
  %v311 = vlaneseq
  %v312 = vshrl.u32 %v311, 7
  %v313 = vsub.s32 0, %v312
  %v314 = vrot.slane %v261, %v313
  %v315 = vlaneseq
  %v316 = vshrl.u32 %v315, 7
  %v317 = vsub.s32 1, %v316
  %v318 = vrot.slane %v261, %v317
  %v319 = vlaneseq
  %v320 = vshrl.u32 %v319, 7
  %v321 = vsub.s32 0, %v320
  %v322 = vrot.slane %v244, %v321
  %v323 = vlaneseq
  %v324 = vshrl.u32 %v323, 7
  %v325 = vsub.s32 1, %v324
  %v326 = vrot.slane %v244, %v325
  %v327 = vlaneseq
  %v328 = vshrl.u32 %v327, 7
  %v329 = vsub.s32 0, %v328
  %v330 = vrot.slane %v258, %v329
  %v331 = vlaneseq
  %v332 = vshrl.u32 %v331, 7
  %v333 = vsub.s32 1, %v332
  %v334 = vrot.slane %v258, %v333
  %v335 = vlaneseq
  %v336 = vshrl.u32 %v335, 7
  %v337 = vsub.s32 0, %v336
  %v338 = vrot.slane %v260, %v337
  %v339 = vlaneseq
  %v340 = vshrl.u32 %v339, 7
  %v341 = vsub.s32 1, %v340
  %v342 = vrot.slane %v260, %v341
  %v343 = vlaneseq
  %v344 = vshrl.u32 %v343, 7
  %v345 = vsub.s32 0, %v344
  %v346 = vrot.slane %v262, %v345
  %v347 = vlaneseq
  %v348 = vshrl.u32 %v347, 7
  %v349 = vsub.s32 1, %v348
  %v350 = vrot.slane %v262, %v349
  %v351 = vlaneseq
  %v352 = vshrl.u32 %v351, 7
  %v353 = vsub.s32 0, %v352
  %v354 = vrot.slane %v278, %v353
  %v355 = vlaneseq
  %v356 = vshrl.u32 %v355, 7
  %v357 = vsub.s32 1, %v356
  %v358 = vrot.slane %v278, %v357
  %v359 = vlaneseq
  %v360 = vshrl.u32 %v359, 7
  %v361 = vsub.s32 0, %v360
  %v362 = vrot.slane %v285, %v361
  %v363 = vlaneseq
  %v364 = vshrl.u32 %v363, 7
  %v365 = vsub.s32 1, %v364
  %v366 = vrot.slane %v285, %v365
  %v367 = vlaneseq
  %v368 = vshrl.u32 %v367, 7
  %v369 = vsub.s32 0, %v368
  %v370 = vrot.slane %v286, %v369
  %v371 = vlaneseq
  %v372 = vshrl.u32 %v371, 7
  %v373 = vsub.s32 1, %v372
  %v374 = vrot.slane %v286, %v373
  %v397 = vmul.f32 %v153, %v290
  %v398 = vmul.f32 %v155, %v294
  %v399 = vmul.f32 %v157, %v298
  %v400 = vmul.f32 %v159, %v302
  %v401 = vmul.f32 %v163, %v306
  %v402 = vmul.f32 %v165, %v310
  %v403 = vmul.f32 %v167, %v314
  %v404 = vmul.f32 %v169, %v318
  %v405 = vmul.f32 %v173, %v322
  %v406 = vmul.f32 %v175, %v326
  %v407 = vmul.f32 %v177, %v330
  %v408 = vmul.f32 %v179, %v334
  %v409 = vmul.f32 %v183, %v338
  %v410 = vmul.f32 %v185, %v342
  %v411 = vmul.f32 %v187, %v346
  %v412 = vmul.f32 %v189, %v350
  %v413 = vmul.f32 %v193, %v354
  %v414 = vmul.f32 %v195, %v358
  %v415 = vmul.f32 %v197, %v362
  %v416 = vmul.f32 %v199, %v366
  %v417 = vmul.f32 %v203, %v370
  %v418 = vmul.f32 %v205, %v374
  %v421 = vcombine.high %v32, %v33
  %v423 = vunpack.c.l.s4 1966171168
  %v424 = vunpack.c.0.s8 %v423
  %v425 = vlaneseq
  %v426 = vshrl.u32 %v425, 7
  %v427 = vsub.s32 %v424, %v426
  %v428 = vrot.slane %v421, %v427
  %v429 = vcombine.high %v428, %v428
  %v431 = vunpack.c.l.s4 1966171168
  %v432 = vunpack.c.0.s8 %v431
  %v433 = vlaneseq
  %v434 = vshrl.u32 %v433, 7
  %v435 = vsub.s32 %v432, %v434
  %v436 = vrot.slane %v428, %v435
  %v438 = vunpack.c.l.s4 1966171168
  %v439 = vunpack.c.0.s8 %v438
  %v440 = vlaneseq
  %v441 = vshrl.u32 %v440, 7
  %v442 = vsub.s32 %v439, %v441
  %v443 = vrot.slane %v429, %v442
  %v444 = vcombine.high %v436, %v436
  %v445 = vcombine.high %v285, %v285
  %v446 = vcombine.high %v443, %v443
  %v447 = vcombine.low %v34, %v35
  %v448 = vcombine.high %v34, %v35
  %v450 = vunpack.c.l.s4 1966171168
  %v451 = vunpack.c.0.s8 %v450
  %v452 = vlaneseq
  %v453 = vshrl.u32 %v452, 7
  %v454 = vsub.s32 %v451, %v453
  %v455 = vrot.slane %v447, %v454
  %v457 = vunpack.c.l.s4 1966171168
  %v458 = vunpack.c.0.s8 %v457
  %v459 = vlaneseq
  %v460 = vshrl.u32 %v459, 7
  %v461 = vsub.s32 %v458, %v460
  %v462 = vrot.slane %v448, %v461
  %v463 = vcombine.high %v455, %v455
  %v464 = vcombine.high %v462, %v462
  %v466 = vunpack.c.l.s4 1966171168
  %v467 = vunpack.c.0.s8 %v466
  %v468 = vlaneseq
  %v469 = vshrl.u32 %v468, 7
  %v470 = vsub.s32 %v467, %v469
  %v471 = vrot.slane %v455, %v470
  %v473 = vunpack.c.l.s4 1966171168
  %v474 = vunpack.c.0.s8 %v473
  %v475 = vlaneseq
  %v476 = vshrl.u32 %v475, 7
  %v477 = vsub.s32 %v474, %v476
  %v478 = vrot.slane %v462, %v477
  %v480 = vunpack.c.l.s4 1966171168
  %v481 = vunpack.c.0.s8 %v480
  %v482 = vlaneseq
  %v483 = vshrl.u32 %v482, 7
  %v484 = vsub.s32 %v481, %v483
  %v485 = vrot.slane %v463, %v484
  %v487 = vunpack.c.l.s4 1966171168
  %v488 = vunpack.c.0.s8 %v487
  %v489 = vlaneseq
  %v490 = vshrl.u32 %v489, 7
  %v491 = vsub.s32 %v488, %v490
  %v492 = vrot.slane %v464, %v491
  %v493 = vcombine.high %v471, %v471
  %v494 = vcombine.high %v485, %v485
  %v495 = vlaneseq
  %v496 = vshrl.u32 %v495, 7
  %v497 = vsub.s32 0, %v496
  %v498 = vrot.slane %v445, %v497
  %v499 = vlaneseq
  %v500 = vshrl.u32 %v499, 7
  %v501 = vsub.s32 1, %v500
  %v502 = vrot.slane %v445, %v501
  %v503 = vlaneseq
  %v504 = vshrl.u32 %v503, 7
  %v505 = vsub.s32 0, %v504
  %v506 = vrot.slane %v436, %v505
  %v507 = vlaneseq
  %v508 = vshrl.u32 %v507, 7
  %v509 = vsub.s32 1, %v508
  %v510 = vrot.slane %v436, %v509
  %v511 = vlaneseq
  %v512 = vshrl.u32 %v511, 7
  %v513 = vsub.s32 0, %v512
  %v514 = vrot.slane %v443, %v513
  %v515 = vlaneseq
  %v516 = vshrl.u32 %v515, 7
  %v517 = vsub.s32 1, %v516
  %v518 = vrot.slane %v443, %v517
  %v519 = vlaneseq
  %v520 = vshrl.u32 %v519, 7
  %v521 = vsub.s32 0, %v520
  %v522 = vrot.slane %v444, %v521
  %v523 = vlaneseq
  %v524 = vshrl.u32 %v523, 7
  %v525 = vsub.s32 1, %v524
  %v526 = vrot.slane %v444, %v525
  %v527 = vlaneseq
  %v528 = vshrl.u32 %v527, 7
  %v529 = vsub.s32 0, %v528
  %v530 = vrot.slane %v446, %v529
  %v531 = vlaneseq
  %v532 = vshrl.u32 %v531, 7
  %v533 = vsub.s32 1, %v532
  %v534 = vrot.slane %v446, %v533
  %v535 = vlaneseq
  %v536 = vshrl.u32 %v535, 7
  %v537 = vsub.s32 0, %v536
  %v538 = vrot.slane %v471, %v537
  %v539 = vlaneseq
  %v540 = vshrl.u32 %v539, 7
  %v541 = vsub.s32 1, %v540
  %v542 = vrot.slane %v471, %v541
  %v543 = vlaneseq
  %v544 = vshrl.u32 %v543, 7
  %v545 = vsub.s32 0, %v544
  %v546 = vrot.slane %v485, %v545
  %v547 = vlaneseq
  %v548 = vshrl.u32 %v547, 7
  %v549 = vsub.s32 1, %v548
  %v550 = vrot.slane %v485, %v549
  %v551 = vlaneseq
  %v552 = vshrl.u32 %v551, 7
  %v553 = vsub.s32 0, %v552
  %v554 = vrot.slane %v493, %v553
  %v555 = vlaneseq
  %v556 = vshrl.u32 %v555, 7
  %v557 = vsub.s32 1, %v556
  %v558 = vrot.slane %v493, %v557
  %v559 = vlaneseq
  %v560 = vshrl.u32 %v559, 7
  %v561 = vsub.s32 0, %v560
  %v562 = vrot.slane %v494, %v561
  %v563 = vlaneseq
  %v564 = vshrl.u32 %v563, 7
  %v565 = vsub.s32 1, %v564
  %v566 = vrot.slane %v494, %v565
  %v567 = vlaneseq
  %v568 = vshrl.u32 %v567, 7
  %v569 = vsub.s32 0, %v568
  %v570 = vrot.slane %v478, %v569
  %v571 = vlaneseq
  %v572 = vshrl.u32 %v571, 7
  %v573 = vsub.s32 1, %v572
  %v574 = vrot.slane %v478, %v573
  %v575 = vlaneseq
  %v576 = vshrl.u32 %v575, 7
  %v577 = vsub.s32 0, %v576
  %v578 = vrot.slane %v492, %v577
  %v579 = vlaneseq
  %v580 = vshrl.u32 %v579, 7
  %v581 = vsub.s32 1, %v580
  %v582 = vrot.slane %v492, %v581
  %v605 = vadd.f32 %v397, %v498
  %v606 = vadd.f32 %v398, %v502
  %v607 = vadd.f32 %v399, %v506
  %v608 = vadd.f32 %v400, %v510
  %v609 = vadd.f32 %v401, %v514
  %v610 = vadd.f32 %v402, %v518
  %v611 = vadd.f32 %v403, %v522
  %v612 = vadd.f32 %v404, %v526
  %v613 = vadd.f32 %v405, %v530
  %v614 = vadd.f32 %v406, %v534
  %v615 = vadd.f32 %v407, %v538
  %v616 = vadd.f32 %v408, %v542
  %v617 = vadd.f32 %v409, %v546
  %v618 = vadd.f32 %v410, %v550
  %v619 = vadd.f32 %v411, %v554
  %v620 = vadd.f32 %v412, %v558
  %v621 = vadd.f32 %v413, %v562
  %v622 = vadd.f32 %v414, %v566
  %v623 = vadd.f32 %v415, %v570
  %v624 = vadd.f32 %v416, %v574
  %v625 = vadd.f32 %v417, %v578
  %v626 = vadd.f32 %v418, %v582
  %627 = vst [vmem:[#allocation2] sm:$0xff] %v605
  %628 = vst [vmem:[#allocation2 + $0x8] sm:$0xff] %v606
  %629 = vst [vmem:[#allocation2 + $0x10] sm:$0xff] %v607
  %630 = vst [vmem:[#allocation2 + $0x18] sm:$0xff] %v608
  %631 = vst [vmem:[#allocation2 + $0x20] sm:$0xff] %v609
  %632 = vst [vmem:[#allocation2 + $0x28] sm:$0xff] %v610
  %633 = vst [vmem:[#allocation2 + $0x30] sm:$0xff] %v611
  %634 = vst [vmem:[#allocation2 + $0x38] sm:$0xff] %v612
  %635 = vst [vmem:[#allocation2 + $0x40] sm:$0xff] %v613
  %636 = vst [vmem:[#allocation2 + $0x48] sm:$0xff] %v614
  %637 = vst [vmem:[#allocation2 + $0x50] sm:$0xff] %v615
  %638 = vst [vmem:[#allocation2 + $0x58] sm:$0xff] %v616
  %639 = vst [vmem:[#allocation2 + $0x60] sm:$0xff] %v617
  %640 = vst [vmem:[#allocation2 + $0x68] sm:$0xff] %v618
  %641 = vst [vmem:[#allocation2 + $0x70] sm:$0xff] %v619
  %642 = vst [vmem:[#allocation2 + $0x78] sm:$0xff] %v620
  %643 = vst [vmem:[#allocation2 + $0x80] sm:$0xff] %v621
  %644 = vst [vmem:[#allocation2 + $0x88] sm:$0xff] %v622
  %645 = vst [vmem:[#allocation2 + $0x90] sm:$0xff] %v623
  %646 = vst [vmem:[#allocation2 + $0x98] sm:$0xff] %v624
  %647 = vst [vmem:[#allocation2 + $0xa0] sm:$0xff] %v625
  %648 = vst [vmem:[#allocation2 + $0xa8] sm:$0xff] %v626
  %v649 = vld [vmem:[%s3] sm:$0xff]
  %v650 = vld [vmem:[%s3 + $0x8] sm:$0xff]
  %v651 = vld [vmem:[%s3 + $0x10] sm:$0xff]
  %v652 = vld [vmem:[%s3 + $0x18] sm:$0xff]
  %v653 = vld [vmem:[%s3 + $0x20] sm:$0xff]
  %v654 = vld [vmem:[%s3 + $0x28] sm:$0xff]
  %v655 = vld [vmem:[%s3 + $0x30] sm:$0xff]
  %v656 = vld [vmem:[%s3 + $0x38] sm:$0xff]
  %v665 = vunpack.c.l.b16 %v649
  %v666 = vunpack.c.h.b16 %v649
  %v667 = vunpack.c.l.b16 %v650
  %v668 = vunpack.c.h.b16 %v650
  %v669 = vunpack.c.l.b16 %v651
  %v670 = vunpack.c.h.b16 %v651
  %v671 = vunpack.c.l.b16 %v652
  %v672 = vunpack.c.h.b16 %v652
  %v673 = vunpack.c.l.b16 %v653
  %v674 = vunpack.c.h.b16 %v653
  %v675 = vunpack.c.l.b16 %v654
  %v676 = vunpack.c.h.b16 %v654
  %v677 = vunpack.c.l.b16 %v655
  %v678 = vunpack.c.h.b16 %v655
  %v679 = vunpack.c.l.b16 %v656
  %v680 = vunpack.c.h.b16 %v656
  %v681 = vpack.c.b16 %v667, %v665
  %v682 = vpack.c.b16 %v668, %v666
  %v683 = vpack.c.b16 %v671, %v669
  %v684 = vpack.c.b16 %v672, %v670
  %v685 = vpack.c.b16 %v675, %v673
  %v686 = vpack.c.b16 %v676, %v674
  %v687 = vpack.c.b16 %v679, %v677
  %v688 = vpack.c.b16 %v680, %v678
  %vm697 = vcmask 523264
  %v699 = vsel %vm697, 0, 0
  %701 = vmatprep.subr.bf16.mxu0 0
  %702 = vmatpush1.bf16.msra.mxu0 0
  %703 = vmatprep.subr.bf16.mxu0 0
  %704 = vmatpush1.bf16.msra.mxu0 0
  %705 = vmatprep.subr.bf16.mxu0 0
  %706 = vmatpush1.bf16.msra.mxu0 0
  %707 = vmatprep.subr.bf16.mxu0 0
  %708 = vmatpush1.bf16.msra.mxu0 0
  %709 = vmatprep.subr.bf16.mxu0 %v688
  %710 = vmatpush1.bf16.msra.mxu0 %v687
  %711 = vmatprep.subr.bf16.mxu0 %v686
  %712 = vmatpush1.bf16.msra.mxu0 %v685
  %713 = vmatprep.subr.bf16.mxu0 %v684
  %714 = vmatpush1.bf16.msra.mxu0 %v683
  %715 = vmatprep.subr.bf16.mxu0 %v682
  %716 = vmatpush1.bf16.msra.mxu0 %v681
  %717 = vmatprep.subr.bf16.mxu0 0
  %718 = vmatpush2.bf16.msra.mxu0 0
  %719 = vmatprep.subr.bf16.mxu0 0
  %720 = vmatpush2.bf16.msra.mxu0 0
  %721 = vmatprep.subr.bf16.mxu0 0
  %722 = vmatpush2.bf16.msra.mxu0 0
  %723 = vmatprep.subr.bf16.mxu0 0
  %724 = vmatpush2.bf16.msra.mxu0 0
  %725 = vmatprep.subr.bf16.mxu0 0
  %726 = vmatpush2.bf16.msra.mxu0 0
  %727 = vmatprep.subr.bf16.mxu0 0
  %728 = vmatpush2.bf16.msra.mxu0 0
  %729 = vmatprep.subr.bf16.mxu0 0
  %730 = vmatpush2.bf16.msra.mxu0 0
  %731 = vmatprep.subr.bf16.mxu0 0
  %732 = vmatpush2.bf16.msra.mxu0 0
  %733 = vmatprep.mubr.bf16.mxu0 0
  %734 = vmatmul.mubr.bf16.gmra.mxu0 %v699
  %v735 = vpop.f32.mrf.mxu0
  %v736 = vadd.f32 0.0, %v735
  %v737 = vpop.f32.mrf.mxu0
  %v738 = vadd.f32 0.0, %v737
  %v739 = vpop.f32.mrf.mxu0
  %v740 = vpop.f32.mrf.mxu0
  %741 = vdwg.mxu0
  %v742 = vld [vmem:[#allocation2] sm:$0xff]
  %v743 = vld [vmem:[#allocation2 + $0x8] sm:$0xff]
  %v744 = vadd.f32 %v742, %v736
  %v745 = vadd.f32 %v743, %v738
  %v746 = vtanh.pop %v744
  %v747 = vtanh.pop %v745
  %v748 = vlaneseq
  %v749 = vshrl.u32 %v748, 7
  %v750 = vsub.s32 6, %v749
  %v751 = vrot.slane %v34, %v750
  %v752 = vlaneseq
  %v753 = vshrl.u32 %v752, 7
  %v754 = vsub.s32 6, %v753
  %v755 = vrot.slane %v35, %v754
  %v756 = vmul.f32 %v746, %v751
  %v757 = vmul.f32 %v747, %v755
  %v758 = vlaneseq
  %v759 = vshrl.u32 %v758, 7
  %v760 = vsub.s32 7, %v759
  %v761 = vrot.slane %v34, %v760
  %v762 = vlaneseq
  %v763 = vshrl.u32 %v762, 7
  %v764 = vsub.s32 7, %v763
  %v765 = vrot.slane %v35, %v764
  %v766 = vadd.f32 %v756, %v761
  %v767 = vadd.f32 %v757, %v765
  %v768 = vmul.f32 %v766, 0.0
  %v769 = vmul.f32 %v766, %v767
  %771 = vrot.lane.b32.xlu0 %v769, 64
  %v772 = vpop.permute.xlu0 %771
  %v774 = vadd.f32 %v768, %v772
  %v775 = vtanh.pop %v774
  %v776 = vmul.f32 %v767, %v775
  %v777 = vpack.c.bf16 %v776, %v776
  %779 = vrot.lane.b32.xlu0 %v777, 64
  %v780 = vpop.permute.xlu0 %779
  %v782 = vsel %vm697, %v780, 0
  %784 = vmatprep.subr.bf16.mxu0 0
  %785 = vmatpush1.bf16.msra.mxu0 0
  %786 = vmatprep.subr.bf16.mxu0 0
  %787 = vmatpush1.bf16.msra.mxu0 0
  %788 = vmatprep.subr.bf16.mxu0 0
  %789 = vmatpush1.bf16.msra.mxu0 0
  %790 = vmatprep.subr.bf16.mxu0 0
  %791 = vmatpush1.bf16.msra.mxu0 0
  %792 = vmatprep.subr.bf16.mxu0 %v688
  %793 = vmatpush1.bf16.msra.mxu0 %v687
  %794 = vmatprep.subr.bf16.mxu0 %v686
  %795 = vmatpush1.bf16.msra.mxu0 %v685
  %796 = vmatprep.subr.bf16.mxu0 %v684
  %797 = vmatpush1.bf16.msra.mxu0 %v683
  %798 = vmatprep.subr.bf16.mxu0 %v682
  %799 = vmatpush1.bf16.msra.mxu0 %v681
  %800 = vmatprep.subr.bf16.mxu0 0
  %801 = vmatpush2.bf16.msra.mxu0 0
  %802 = vmatprep.subr.bf16.mxu0 0
  %803 = vmatpush2.bf16.msra.mxu0 0
  %804 = vmatprep.subr.bf16.mxu0 0
  %805 = vmatpush2.bf16.msra.mxu0 0
  %806 = vmatprep.subr.bf16.mxu0 0
  %807 = vmatpush2.bf16.msra.mxu0 0
  %808 = vmatprep.subr.bf16.mxu0 0
  %809 = vmatpush2.bf16.msra.mxu0 0
  %810 = vmatprep.subr.bf16.mxu0 0
  %811 = vmatpush2.bf16.msra.mxu0 0
  %812 = vmatprep.subr.bf16.mxu0 0
  %813 = vmatpush2.bf16.msra.mxu0 0
  %814 = vmatprep.subr.bf16.mxu0 0
  %815 = vmatpush2.bf16.msra.mxu0 0
  %816 = vmatprep.mubr.bf16.mxu0 0
  %817 = vmatmul.mubr.bf16.gmra.mxu0 %v782
  %v818 = vpop.f32.mrf.mxu0
  %v819 = vadd.f32 0.0, %v818
  %v820 = vpop.f32.mrf.mxu0
  %v821 = vadd.f32 0.0, %v820
  %v822 = vpop.f32.mrf.mxu0
  %v823 = vpop.f32.mrf.mxu0
  %824 = vdwg.mxu0
  %s825 = scalar_lea.vmem [#allocation2], 16
  %v826 = vld [vmem:[%s825] sm:$0xff]
  %v827 = vld [vmem:[%s825 + $0x8] sm:$0xff]
  %v828 = vadd.f32 %v826, %v819
  %v829 = vadd.f32 %v827, %v821
  %v830 = vtanh.pop %v828
  %v831 = vtanh.pop %v829
  %v832 = vmul.f32 %v830, %v751
  %v833 = vmul.f32 %v831, %v755
  %v834 = vadd.f32 %v832, %v761
  %v835 = vadd.f32 %v833, %v765
  %v836 = vmul.f32 %v834, %v774
  %v837 = vmul.f32 %v834, %v835
  %839 = vrot.lane.b32.xlu0 %v837, 64
  %v840 = vpop.permute.xlu0 %839
  %v842 = vadd.f32 %v836, %v840
  %v843 = vtanh.pop %v842
  %v844 = vmul.f32 %v835, %v843
  %v845 = vpack.c.bf16 %v844, %v844
  %847 = vrot.lane.b32.xlu0 %v845, 64
  %v848 = vpop.permute.xlu0 %847
  %v850 = vsel %vm697, %v848, 0
  %852 = vmatprep.subr.bf16.mxu0 0
  %853 = vmatpush1.bf16.msra.mxu0 0
  %854 = vmatprep.subr.bf16.mxu0 0
  %855 = vmatpush1.bf16.msra.mxu0 0
  %856 = vmatprep.subr.bf16.mxu0 0
  %857 = vmatpush1.bf16.msra.mxu0 0
  %858 = vmatprep.subr.bf16.mxu0 0
  %859 = vmatpush1.bf16.msra.mxu0 0
  %860 = vmatprep.subr.bf16.mxu0 %v688
  %861 = vmatpush1.bf16.msra.mxu0 %v687
  %862 = vmatprep.subr.bf16.mxu0 %v686
  %863 = vmatpush1.bf16.msra.mxu0 %v685
  %864 = vmatprep.subr.bf16.mxu0 %v684
  %865 = vmatpush1.bf16.msra.mxu0 %v683
  %866 = vmatprep.subr.bf16.mxu0 %v682
  %867 = vmatpush1.bf16.msra.mxu0 %v681
  %868 = vmatprep.subr.bf16.mxu0 0
  %869 = vmatpush2.bf16.msra.mxu0 0
  %870 = vmatprep.subr.bf16.mxu0 0
  %871 = vmatpush2.bf16.msra.mxu0 0
  %872 = vmatprep.subr.bf16.mxu0 0
  %873 = vmatpush2.bf16.msra.mxu0 0
  %874 = vmatprep.subr.bf16.mxu0 0
  %875 = vmatpush2.bf16.msra.mxu0 0
  %876 = vmatprep.subr.bf16.mxu0 0
  %877 = vmatpush2.bf16.msra.mxu0 0
  %878 = vmatprep.subr.bf16.mxu0 0
  %879 = vmatpush2.bf16.msra.mxu0 0
  %880 = vmatprep.subr.bf16.mxu0 0
  %881 = vmatpush2.bf16.msra.mxu0 0
  %882 = vmatprep.subr.bf16.mxu0 0
  %883 = vmatpush2.bf16.msra.mxu0 0
  %884 = vmatprep.mubr.bf16.mxu0 0
  %885 = vmatmul.mubr.bf16.gmra.mxu0 %v850
  %v886 = vpop.f32.mrf.mxu0
  %v887 = vadd.f32 0.0, %v886
  %v888 = vpop.f32.mrf.mxu0
  %v889 = vadd.f32 0.0, %v888
  %v890 = vpop.f32.mrf.mxu0
  %v891 = vpop.f32.mrf.mxu0
  %892 = vdwg.mxu0
  %s893 = scalar_lea.vmem [#allocation2], 32
  %v894 = vld [vmem:[%s893] sm:$0xff]
  %v895 = vld [vmem:[%s893 + $0x8] sm:$0xff]
  %v896 = vadd.f32 %v894, %v887
  %v897 = vadd.f32 %v895, %v889
  %v898 = vtanh.pop %v896
  %v899 = vtanh.pop %v897
  %v900 = vmul.f32 %v898, %v751
  %v901 = vmul.f32 %v899, %v755
  %v902 = vadd.f32 %v900, %v761
  %v903 = vadd.f32 %v901, %v765
  %v904 = vmul.f32 %v902, %v842
  %v905 = vmul.f32 %v902, %v903
  %907 = vrot.lane.b32.xlu0 %v905, 64
  %v908 = vpop.permute.xlu0 %907
  %v910 = vadd.f32 %v904, %v908
  %v911 = vtanh.pop %v910
  %v912 = vmul.f32 %v903, %v911
  %v913 = vpack.c.bf16 %v912, %v912
  %915 = vrot.lane.b32.xlu0 %v913, 64
  %v916 = vpop.permute.xlu0 %915
  %v918 = vsel %vm697, %v916, 0
  %920 = vmatprep.subr.bf16.mxu0 0
  %921 = vmatpush1.bf16.msra.mxu0 0
  %922 = vmatprep.subr.bf16.mxu0 0
  %923 = vmatpush1.bf16.msra.mxu0 0
  %924 = vmatprep.subr.bf16.mxu0 0
  %925 = vmatpush1.bf16.msra.mxu0 0
  %926 = vmatprep.subr.bf16.mxu0 0
  %927 = vmatpush1.bf16.msra.mxu0 0
  %928 = vmatprep.subr.bf16.mxu0 %v688
  %929 = vmatpush1.bf16.msra.mxu0 %v687
  %930 = vmatprep.subr.bf16.mxu0 %v686
  %931 = vmatpush1.bf16.msra.mxu0 %v685
  %932 = vmatprep.subr.bf16.mxu0 %v684
  %933 = vmatpush1.bf16.msra.mxu0 %v683
  %934 = vmatprep.subr.bf16.mxu0 %v682
  %935 = vmatpush1.bf16.msra.mxu0 %v681
  %936 = vmatprep.subr.bf16.mxu0 0
  %937 = vmatpush2.bf16.msra.mxu0 0
  %938 = vmatprep.subr.bf16.mxu0 0
  %939 = vmatpush2.bf16.msra.mxu0 0
  %940 = vmatprep.subr.bf16.mxu0 0
  %941 = vmatpush2.bf16.msra.mxu0 0
  %942 = vmatprep.subr.bf16.mxu0 0
  %943 = vmatpush2.bf16.msra.mxu0 0
  %944 = vmatprep.subr.bf16.mxu0 0
  %945 = vmatpush2.bf16.msra.mxu0 0
  %946 = vmatprep.subr.bf16.mxu0 0
  %947 = vmatpush2.bf16.msra.mxu0 0
  %948 = vmatprep.subr.bf16.mxu0 0
  %949 = vmatpush2.bf16.msra.mxu0 0
  %950 = vmatprep.subr.bf16.mxu0 0
  %951 = vmatpush2.bf16.msra.mxu0 0
  %952 = vmatprep.mubr.bf16.mxu0 0
  %953 = vmatmul.mubr.bf16.gmra.mxu0 %v918
  %v954 = vpop.f32.mrf.mxu0
  %v955 = vadd.f32 0.0, %v954
  %v956 = vpop.f32.mrf.mxu0
  %v957 = vadd.f32 0.0, %v956
  %v958 = vpop.f32.mrf.mxu0
  %v959 = vpop.f32.mrf.mxu0
  %960 = vdwg.mxu0
  %s961 = scalar_lea.vmem [#allocation2], 48
  %v962 = vld [vmem:[%s961] sm:$0xff]
  %v963 = vld [vmem:[%s961 + $0x8] sm:$0xff]
  %v964 = vadd.f32 %v962, %v955
  %v965 = vadd.f32 %v963, %v957
  %v966 = vtanh.pop %v964
  %v967 = vtanh.pop %v965
  %v968 = vmul.f32 %v966, %v751
  %v969 = vmul.f32 %v967, %v755
  %v970 = vadd.f32 %v968, %v761
  %v971 = vadd.f32 %v969, %v765
  %v972 = vmul.f32 %v970, %v910
  %v973 = vmul.f32 %v970, %v971
  %975 = vrot.lane.b32.xlu0 %v973, 64
  %v976 = vpop.permute.xlu0 %975
  %v978 = vadd.f32 %v972, %v976
  %v979 = vtanh.pop %v978
  %v980 = vmul.f32 %v971, %v979
  %v981 = vpack.c.bf16 %v980, %v980
  %983 = vrot.lane.b32.xlu0 %v981, 64
  %v984 = vpop.permute.xlu0 %983
  %v986 = vsel %vm697, %v984, 0
  %988 = vmatprep.subr.bf16.mxu0 0
  %989 = vmatpush1.bf16.msra.mxu0 0
  %990 = vmatprep.subr.bf16.mxu0 0
  %991 = vmatpush1.bf16.msra.mxu0 0
  %992 = vmatprep.subr.bf16.mxu0 0
  %993 = vmatpush1.bf16.msra.mxu0 0
  %994 = vmatprep.subr.bf16.mxu0 0
  %995 = vmatpush1.bf16.msra.mxu0 0
  %996 = vmatprep.subr.bf16.mxu0 %v688
  %997 = vmatpush1.bf16.msra.mxu0 %v687
  %998 = vmatprep.subr.bf16.mxu0 %v686
  %999 = vmatpush1.bf16.msra.mxu0 %v685
  %1000 = vmatprep.subr.bf16.mxu0 %v684
  %1001 = vmatpush1.bf16.msra.mxu0 %v683
  %1002 = vmatprep.subr.bf16.mxu0 %v682
  %1003 = vmatpush1.bf16.msra.mxu0 %v681
  %1004 = vmatprep.subr.bf16.mxu0 0
  %1005 = vmatpush2.bf16.msra.mxu0 0
  %1006 = vmatprep.subr.bf16.mxu0 0
  %1007 = vmatpush2.bf16.msra.mxu0 0
  %1008 = vmatprep.subr.bf16.mxu0 0
  %1009 = vmatpush2.bf16.msra.mxu0 0
  %1010 = vmatprep.subr.bf16.mxu0 0
  %1011 = vmatpush2.bf16.msra.mxu0 0
  %1012 = vmatprep.subr.bf16.mxu0 0
  %1013 = vmatpush2.bf16.msra.mxu0 0
  %1014 = vmatprep.subr.bf16.mxu0 0
  %1015 = vmatpush2.bf16.msra.mxu0 0
  %1016 = vmatprep.subr.bf16.mxu0 0
  %1017 = vmatpush2.bf16.msra.mxu0 0
  %1018 = vmatprep.subr.bf16.mxu0 0
  %1019 = vmatpush2.bf16.msra.mxu0 0
  %1020 = vmatprep.mubr.bf16.mxu0 0
  %1021 = vmatmul.mubr.bf16.gmra.mxu0 %v986
  %v1022 = vpop.f32.mrf.mxu0
  %v1023 = vadd.f32 0.0, %v1022
  %v1024 = vpop.f32.mrf.mxu0
  %v1025 = vadd.f32 0.0, %v1024
  %v1026 = vpop.f32.mrf.mxu0
  %v1027 = vpop.f32.mrf.mxu0
  %1028 = vdwg.mxu0
  %s1029 = scalar_lea.vmem [#allocation2], 64
  %v1030 = vld [vmem:[%s1029] sm:$0xff]
  %v1031 = vld [vmem:[%s1029 + $0x8] sm:$0xff]
  %v1032 = vadd.f32 %v1030, %v1023
  %v1033 = vadd.f32 %v1031, %v1025
  %v1034 = vtanh.pop %v1032
  %v1035 = vtanh.pop %v1033
  %v1036 = vmul.f32 %v1034, %v751
  %v1037 = vmul.f32 %v1035, %v755
  %v1038 = vadd.f32 %v1036, %v761
  %v1039 = vadd.f32 %v1037, %v765
  %v1040 = vmul.f32 %v1038, %v978
  %v1041 = vmul.f32 %v1038, %v1039
  %1043 = vrot.lane.b32.xlu0 %v1041, 64
  %v1044 = vpop.permute.xlu0 %1043
  %v1046 = vadd.f32 %v1040, %v1044
  %v1047 = vtanh.pop %v1046
  %v1048 = vmul.f32 %v1039, %v1047
  %v1049 = vpack.c.bf16 %v1048, %v1048
  %1051 = vrot.lane.b32.xlu0 %v1049, 64
  %v1052 = vpop.permute.xlu0 %1051
  %v1054 = vsel %vm697, %v1052, 0
  %1056 = vmatprep.subr.bf16.mxu0 0
  %1057 = vmatpush1.bf16.msra.mxu0 0
  %1058 = vmatprep.subr.bf16.mxu0 0
  %1059 = vmatpush1.bf16.msra.mxu0 0
  %1060 = vmatprep.subr.bf16.mxu0 0
  %1061 = vmatpush1.bf16.msra.mxu0 0
  %1062 = vmatprep.subr.bf16.mxu0 0
  %1063 = vmatpush1.bf16.msra.mxu0 0
  %1064 = vmatprep.subr.bf16.mxu0 %v688
  %1065 = vmatpush1.bf16.msra.mxu0 %v687
  %1066 = vmatprep.subr.bf16.mxu0 %v686
  %1067 = vmatpush1.bf16.msra.mxu0 %v685
  %1068 = vmatprep.subr.bf16.mxu0 %v684
  %1069 = vmatpush1.bf16.msra.mxu0 %v683
  %1070 = vmatprep.subr.bf16.mxu0 %v682
  %1071 = vmatpush1.bf16.msra.mxu0 %v681
  %1072 = vmatprep.subr.bf16.mxu0 0
  %1073 = vmatpush2.bf16.msra.mxu0 0
  %1074 = vmatprep.subr.bf16.mxu0 0
  %1075 = vmatpush2.bf16.msra.mxu0 0
  %1076 = vmatprep.subr.bf16.mxu0 0
  %1077 = vmatpush2.bf16.msra.mxu0 0
  %1078 = vmatprep.subr.bf16.mxu0 0
  %1079 = vmatpush2.bf16.msra.mxu0 0
  %1080 = vmatprep.subr.bf16.mxu0 0
  %1081 = vmatpush2.bf16.msra.mxu0 0
  %1082 = vmatprep.subr.bf16.mxu0 0
  %1083 = vmatpush2.bf16.msra.mxu0 0
  %1084 = vmatprep.subr.bf16.mxu0 0
  %1085 = vmatpush2.bf16.msra.mxu0 0
  %1086 = vmatprep.subr.bf16.mxu0 0
  %1087 = vmatpush2.bf16.msra.mxu0 0
  %1088 = vmatprep.mubr.bf16.mxu0 0
  %1089 = vmatmul.mubr.bf16.gmra.mxu0 %v1054
  %v1090 = vpop.f32.mrf.mxu0
  %v1091 = vadd.f32 0.0, %v1090
  %v1092 = vpop.f32.mrf.mxu0
  %v1093 = vadd.f32 0.0, %v1092
  %v1094 = vpop.f32.mrf.mxu0
  %v1095 = vpop.f32.mrf.mxu0
  %1096 = vdwg.mxu0
  %s1097 = scalar_lea.vmem [#allocation2], 80
  %v1098 = vld [vmem:[%s1097] sm:$0xff]
  %v1099 = vld [vmem:[%s1097 + $0x8] sm:$0xff]
  %v1100 = vadd.f32 %v1098, %v1091
  %v1101 = vadd.f32 %v1099, %v1093
  %v1102 = vtanh.pop %v1100
  %v1103 = vtanh.pop %v1101
  %v1104 = vmul.f32 %v1102, %v751
  %v1105 = vmul.f32 %v1103, %v755
  %v1106 = vadd.f32 %v1104, %v761
  %v1107 = vadd.f32 %v1105, %v765
  %v1108 = vmul.f32 %v1106, %v1046
  %v1109 = vmul.f32 %v1106, %v1107
  %1111 = vrot.lane.b32.xlu0 %v1109, 64
  %v1112 = vpop.permute.xlu0 %1111
  %v1114 = vadd.f32 %v1108, %v1112
  %v1115 = vtanh.pop %v1114
  %v1116 = vmul.f32 %v1107, %v1115
  %v1117 = vpack.c.bf16 %v1116, %v1116
  %1119 = vrot.lane.b32.xlu0 %v1117, 64
  %v1120 = vpop.permute.xlu0 %1119
  %v1122 = vsel %vm697, %v1120, 0
  %1124 = vmatprep.subr.bf16.mxu0 0
  %1125 = vmatpush1.bf16.msra.mxu0 0
  %1126 = vmatprep.subr.bf16.mxu0 0
  %1127 = vmatpush1.bf16.msra.mxu0 0
  %1128 = vmatprep.subr.bf16.mxu0 0
  %1129 = vmatpush1.bf16.msra.mxu0 0
  %1130 = vmatprep.subr.bf16.mxu0 0
  %1131 = vmatpush1.bf16.msra.mxu0 0
  %1132 = vmatprep.subr.bf16.mxu0 %v688
  %1133 = vmatpush1.bf16.msra.mxu0 %v687
  %1134 = vmatprep.subr.bf16.mxu0 %v686
  %1135 = vmatpush1.bf16.msra.mxu0 %v685
  %1136 = vmatprep.subr.bf16.mxu0 %v684
  %1137 = vmatpush1.bf16.msra.mxu0 %v683
  %1138 = vmatprep.subr.bf16.mxu0 %v682
  %1139 = vmatpush1.bf16.msra.mxu0 %v681
  %1140 = vmatprep.subr.bf16.mxu0 0
  %1141 = vmatpush2.bf16.msra.mxu0 0
  %1142 = vmatprep.subr.bf16.mxu0 0
  %1143 = vmatpush2.bf16.msra.mxu0 0
  %1144 = vmatprep.subr.bf16.mxu0 0
  %1145 = vmatpush2.bf16.msra.mxu0 0
  %1146 = vmatprep.subr.bf16.mxu0 0
  %1147 = vmatpush2.bf16.msra.mxu0 0
  %1148 = vmatprep.subr.bf16.mxu0 0
  %1149 = vmatpush2.bf16.msra.mxu0 0
  %1150 = vmatprep.subr.bf16.mxu0 0
  %1151 = vmatpush2.bf16.msra.mxu0 0
  %1152 = vmatprep.subr.bf16.mxu0 0
  %1153 = vmatpush2.bf16.msra.mxu0 0
  %1154 = vmatprep.subr.bf16.mxu0 0
  %1155 = vmatpush2.bf16.msra.mxu0 0
  %1156 = vmatprep.mubr.bf16.mxu0 0
  %1157 = vmatmul.mubr.bf16.gmra.mxu0 %v1122
  %v1158 = vpop.f32.mrf.mxu0
  %v1159 = vadd.f32 0.0, %v1158
  %v1160 = vpop.f32.mrf.mxu0
  %v1161 = vadd.f32 0.0, %v1160
  %v1162 = vpop.f32.mrf.mxu0
  %v1163 = vpop.f32.mrf.mxu0
  %1164 = vdwg.mxu0
  %s1165 = scalar_lea.vmem [#allocation2], 96
  %v1166 = vld [vmem:[%s1165] sm:$0xff]
  %v1167 = vld [vmem:[%s1165 + $0x8] sm:$0xff]
  %v1168 = vadd.f32 %v1166, %v1159
  %v1169 = vadd.f32 %v1167, %v1161
  %v1170 = vtanh.pop %v1168
  %v1171 = vtanh.pop %v1169
  %v1172 = vmul.f32 %v1170, %v751
  %v1173 = vmul.f32 %v1171, %v755
  %v1174 = vadd.f32 %v1172, %v761
  %v1175 = vadd.f32 %v1173, %v765
  %v1176 = vmul.f32 %v1174, %v1114
  %v1177 = vmul.f32 %v1174, %v1175
  %1179 = vrot.lane.b32.xlu0 %v1177, 64
  %v1180 = vpop.permute.xlu0 %1179
  %v1182 = vadd.f32 %v1176, %v1180
  %v1183 = vtanh.pop %v1182
  %v1184 = vmul.f32 %v1175, %v1183
  %v1185 = vpack.c.bf16 %v1184, %v1184
  %1187 = vrot.lane.b32.xlu0 %v1185, 64
  %v1188 = vpop.permute.xlu0 %1187
  %v1190 = vsel %vm697, %v1188, 0
  %1192 = vmatprep.subr.bf16.mxu0 0
  %1193 = vmatpush1.bf16.msra.mxu0 0
  %1194 = vmatprep.subr.bf16.mxu0 0
  %1195 = vmatpush1.bf16.msra.mxu0 0
  %1196 = vmatprep.subr.bf16.mxu0 0
  %1197 = vmatpush1.bf16.msra.mxu0 0
  %1198 = vmatprep.subr.bf16.mxu0 0
  %1199 = vmatpush1.bf16.msra.mxu0 0
  %1200 = vmatprep.subr.bf16.mxu0 %v688
  %1201 = vmatpush1.bf16.msra.mxu0 %v687
  %1202 = vmatprep.subr.bf16.mxu0 %v686
  %1203 = vmatpush1.bf16.msra.mxu0 %v685
  %1204 = vmatprep.subr.bf16.mxu0 %v684
  %1205 = vmatpush1.bf16.msra.mxu0 %v683
  %1206 = vmatprep.subr.bf16.mxu0 %v682
  %1207 = vmatpush1.bf16.msra.mxu0 %v681
  %1208 = vmatprep.subr.bf16.mxu0 0
  %1209 = vmatpush2.bf16.msra.mxu0 0
  %1210 = vmatprep.subr.bf16.mxu0 0
  %1211 = vmatpush2.bf16.msra.mxu0 0
  %1212 = vmatprep.subr.bf16.mxu0 0
  %1213 = vmatpush2.bf16.msra.mxu0 0
  %1214 = vmatprep.subr.bf16.mxu0 0
  %1215 = vmatpush2.bf16.msra.mxu0 0
  %1216 = vmatprep.subr.bf16.mxu0 0
  %1217 = vmatpush2.bf16.msra.mxu0 0
  %1218 = vmatprep.subr.bf16.mxu0 0
  %1219 = vmatpush2.bf16.msra.mxu0 0
  %1220 = vmatprep.subr.bf16.mxu0 0
  %1221 = vmatpush2.bf16.msra.mxu0 0
  %1222 = vmatprep.subr.bf16.mxu0 0
  %1223 = vmatpush2.bf16.msra.mxu0 0
  %1224 = vmatprep.mubr.bf16.mxu0 0
  %1225 = vmatmul.mubr.bf16.gmra.mxu0 %v1190
  %v1226 = vpop.f32.mrf.mxu0
  %v1227 = vadd.f32 0.0, %v1226
  %v1228 = vpop.f32.mrf.mxu0
  %v1229 = vadd.f32 0.0, %v1228
  %v1230 = vpop.f32.mrf.mxu0
  %v1231 = vpop.f32.mrf.mxu0
  %1232 = vdwg.mxu0
  %s1233 = scalar_lea.vmem [#allocation2], 112
  %v1234 = vld [vmem:[%s1233] sm:$0xff]
  %v1235 = vld [vmem:[%s1233 + $0x8] sm:$0xff]
  %v1236 = vadd.f32 %v1234, %v1227
  %v1237 = vadd.f32 %v1235, %v1229
  %v1238 = vtanh.pop %v1236
  %v1239 = vtanh.pop %v1237
  %v1240 = vmul.f32 %v1238, %v751
  %v1241 = vmul.f32 %v1239, %v755
  %v1242 = vadd.f32 %v1240, %v761
  %v1243 = vadd.f32 %v1241, %v765
  %v1244 = vmul.f32 %v1242, %v1182
  %v1245 = vmul.f32 %v1242, %v1243
  %1247 = vrot.lane.b32.xlu0 %v1245, 64
  %v1248 = vpop.permute.xlu0 %1247
  %v1250 = vadd.f32 %v1244, %v1248
  %v1251 = vtanh.pop %v1250
  %v1252 = vmul.f32 %v1243, %v1251
  %v1253 = vpack.c.bf16 %v1252, %v1252
  %1255 = vrot.lane.b32.xlu0 %v1253, 64
  %v1256 = vpop.permute.xlu0 %1255
  %v1258 = vsel %vm697, %v1256, 0
  %1260 = vmatprep.subr.bf16.mxu0 0
  %1261 = vmatpush1.bf16.msra.mxu0 0
  %1262 = vmatprep.subr.bf16.mxu0 0
  %1263 = vmatpush1.bf16.msra.mxu0 0
  %1264 = vmatprep.subr.bf16.mxu0 0
  %1265 = vmatpush1.bf16.msra.mxu0 0
  %1266 = vmatprep.subr.bf16.mxu0 0
  %1267 = vmatpush1.bf16.msra.mxu0 0
  %1268 = vmatprep.subr.bf16.mxu0 %v688
  %1269 = vmatpush1.bf16.msra.mxu0 %v687
  %1270 = vmatprep.subr.bf16.mxu0 %v686
  %1271 = vmatpush1.bf16.msra.mxu0 %v685
  %1272 = vmatprep.subr.bf16.mxu0 %v684
  %1273 = vmatpush1.bf16.msra.mxu0 %v683
  %1274 = vmatprep.subr.bf16.mxu0 %v682
  %1275 = vmatpush1.bf16.msra.mxu0 %v681
  %1276 = vmatprep.subr.bf16.mxu0 0
  %1277 = vmatpush2.bf16.msra.mxu0 0
  %1278 = vmatprep.subr.bf16.mxu0 0
  %1279 = vmatpush2.bf16.msra.mxu0 0
  %1280 = vmatprep.subr.bf16.mxu0 0
  %1281 = vmatpush2.bf16.msra.mxu0 0
  %1282 = vmatprep.subr.bf16.mxu0 0
  %1283 = vmatpush2.bf16.msra.mxu0 0
  %1284 = vmatprep.subr.bf16.mxu0 0
  %1285 = vmatpush2.bf16.msra.mxu0 0
  %1286 = vmatprep.subr.bf16.mxu0 0
  %1287 = vmatpush2.bf16.msra.mxu0 0
  %1288 = vmatprep.subr.bf16.mxu0 0
  %1289 = vmatpush2.bf16.msra.mxu0 0
  %1290 = vmatprep.subr.bf16.mxu0 0
  %1291 = vmatpush2.bf16.msra.mxu0 0
  %1292 = vmatprep.mubr.bf16.mxu0 0
  %1293 = vmatmul.mubr.bf16.gmra.mxu0 %v1258
  %v1294 = vpop.f32.mrf.mxu0
  %v1295 = vadd.f32 0.0, %v1294
  %v1296 = vpop.f32.mrf.mxu0
  %v1297 = vadd.f32 0.0, %v1296
  %v1298 = vpop.f32.mrf.mxu0
  %v1299 = vpop.f32.mrf.mxu0
  %1300 = vdwg.mxu0
  %s1301 = scalar_lea.vmem [#allocation2], 128
  %v1302 = vld [vmem:[%s1301] sm:$0xff]
  %v1303 = vld [vmem:[%s1301 + $0x8] sm:$0xff]
  %v1304 = vadd.f32 %v1302, %v1295
  %v1305 = vadd.f32 %v1303, %v1297
  %v1306 = vtanh.pop %v1304
  %v1307 = vtanh.pop %v1305
  %v1308 = vmul.f32 %v1306, %v751
  %v1309 = vmul.f32 %v1307, %v755
  %v1310 = vadd.f32 %v1308, %v761
  %v1311 = vadd.f32 %v1309, %v765
  %v1312 = vmul.f32 %v1310, %v1250
  %v1313 = vmul.f32 %v1310, %v1311
  %1315 = vrot.lane.b32.xlu0 %v1313, 64
  %v1316 = vpop.permute.xlu0 %1315
  %v1318 = vadd.f32 %v1312, %v1316
  %v1319 = vtanh.pop %v1318
  %v1320 = vmul.f32 %v1311, %v1319
  %v1321 = vpack.c.bf16 %v1320, %v1320
  %1323 = vrot.lane.b32.xlu0 %v1321, 64
  %v1324 = vpop.permute.xlu0 %1323
  %v1326 = vsel %vm697, %v1324, 0
  %1328 = vmatprep.subr.bf16.mxu0 0
  %1329 = vmatpush1.bf16.msra.mxu0 0
  %1330 = vmatprep.subr.bf16.mxu0 0
  %1331 = vmatpush1.bf16.msra.mxu0 0
  %1332 = vmatprep.subr.bf16.mxu0 0
  %1333 = vmatpush1.bf16.msra.mxu0 0
  %1334 = vmatprep.subr.bf16.mxu0 0
  %1335 = vmatpush1.bf16.msra.mxu0 0
  %1336 = vmatprep.subr.bf16.mxu0 %v688
  %1337 = vmatpush1.bf16.msra.mxu0 %v687
  %1338 = vmatprep.subr.bf16.mxu0 %v686
  %1339 = vmatpush1.bf16.msra.mxu0 %v685
  %1340 = vmatprep.subr.bf16.mxu0 %v684
  %1341 = vmatpush1.bf16.msra.mxu0 %v683
  %1342 = vmatprep.subr.bf16.mxu0 %v682
  %1343 = vmatpush1.bf16.msra.mxu0 %v681
  %1344 = vmatprep.subr.bf16.mxu0 0
  %1345 = vmatpush2.bf16.msra.mxu0 0
  %1346 = vmatprep.subr.bf16.mxu0 0
  %1347 = vmatpush2.bf16.msra.mxu0 0
  %1348 = vmatprep.subr.bf16.mxu0 0
  %1349 = vmatpush2.bf16.msra.mxu0 0
  %1350 = vmatprep.subr.bf16.mxu0 0
  %1351 = vmatpush2.bf16.msra.mxu0 0
  %1352 = vmatprep.subr.bf16.mxu0 0
  %1353 = vmatpush2.bf16.msra.mxu0 0
  %1354 = vmatprep.subr.bf16.mxu0 0
  %1355 = vmatpush2.bf16.msra.mxu0 0
  %1356 = vmatprep.subr.bf16.mxu0 0
  %1357 = vmatpush2.bf16.msra.mxu0 0
  %1358 = vmatprep.subr.bf16.mxu0 0
  %1359 = vmatpush2.bf16.msra.mxu0 0
  %1360 = vmatprep.mubr.bf16.mxu0 0
  %1361 = vmatmul.mubr.bf16.gmra.mxu0 %v1326
  %v1362 = vpop.f32.mrf.mxu0
  %v1363 = vadd.f32 0.0, %v1362
  %v1364 = vpop.f32.mrf.mxu0
  %v1365 = vadd.f32 0.0, %v1364
  %v1366 = vpop.f32.mrf.mxu0
  %v1367 = vpop.f32.mrf.mxu0
  %1368 = vdwg.mxu0
  %s1369 = scalar_lea.vmem [#allocation2], 144
  %v1370 = vld [vmem:[%s1369] sm:$0xff]
  %v1371 = vld [vmem:[%s1369 + $0x8] sm:$0xff]
  %v1372 = vadd.f32 %v1370, %v1363
  %v1373 = vadd.f32 %v1371, %v1365
  %v1374 = vtanh.pop %v1372
  %v1375 = vtanh.pop %v1373
  %v1376 = vmul.f32 %v1374, %v751
  %v1377 = vmul.f32 %v1375, %v755
  %v1378 = vadd.f32 %v1376, %v761
  %v1379 = vadd.f32 %v1377, %v765
  %v1380 = vmul.f32 %v1378, %v1318
  %v1381 = vmul.f32 %v1378, %v1379
  %1383 = vrot.lane.b32.xlu0 %v1381, 64
  %v1384 = vpop.permute.xlu0 %1383
  %v1386 = vadd.f32 %v1380, %v1384
  %v1387 = vtanh.pop %v1386
  %v1388 = vmul.f32 %v1379, %v1387
  %v1389 = vpack.c.bf16 %v1388, %v1388
  %1391 = vrot.lane.b32.xlu0 %v1389, 64
  %v1392 = vpop.permute.xlu0 %1391
  %v1394 = vsel %vm697, %v1392, 0
  %1396 = vmatprep.subr.bf16.mxu0 0
  %1397 = vmatpush1.bf16.msra.mxu0 0
  %1398 = vmatprep.subr.bf16.mxu0 0
  %1399 = vmatpush1.bf16.msra.mxu0 0
  %1400 = vmatprep.subr.bf16.mxu0 0
  %1401 = vmatpush1.bf16.msra.mxu0 0
  %1402 = vmatprep.subr.bf16.mxu0 0
  %1403 = vmatpush1.bf16.msra.mxu0 0
  %1404 = vmatprep.subr.bf16.mxu0 %v688
  %1405 = vmatpush1.bf16.msra.mxu0 %v687
  %1406 = vmatprep.subr.bf16.mxu0 %v686
  %1407 = vmatpush1.bf16.msra.mxu0 %v685
  %1408 = vmatprep.subr.bf16.mxu0 %v684
  %1409 = vmatpush1.bf16.msra.mxu0 %v683
  %1410 = vmatprep.subr.bf16.mxu0 %v682
  %1411 = vmatpush1.bf16.msra.mxu0 %v681
  %1412 = vmatprep.subr.bf16.mxu0 0
  %1413 = vmatpush2.bf16.msra.mxu0 0
  %1414 = vmatprep.subr.bf16.mxu0 0
  %1415 = vmatpush2.bf16.msra.mxu0 0
  %1416 = vmatprep.subr.bf16.mxu0 0
  %1417 = vmatpush2.bf16.msra.mxu0 0
  %1418 = vmatprep.subr.bf16.mxu0 0
  %1419 = vmatpush2.bf16.msra.mxu0 0
  %1420 = vmatprep.subr.bf16.mxu0 0
  %1421 = vmatpush2.bf16.msra.mxu0 0
  %1422 = vmatprep.subr.bf16.mxu0 0
  %1423 = vmatpush2.bf16.msra.mxu0 0
  %1424 = vmatprep.subr.bf16.mxu0 0
  %1425 = vmatpush2.bf16.msra.mxu0 0
  %1426 = vmatprep.subr.bf16.mxu0 0
  %1427 = vmatpush2.bf16.msra.mxu0 0
  %1428 = vmatprep.mubr.bf16.mxu0 0
  %1429 = vmatmul.mubr.bf16.gmra.mxu0 %v1394
  %v1430 = vpop.f32.mrf.mxu0
  %v1431 = vadd.f32 0.0, %v1430
  %v1432 = vpop.f32.mrf.mxu0
  %v1433 = vadd.f32 0.0, %v1432
  %v1434 = vpop.f32.mrf.mxu0
  %v1435 = vpop.f32.mrf.mxu0
  %1436 = vdwg.mxu0
  %s1437 = scalar_lea.vmem [#allocation2], 160
  %v1438 = vld [vmem:[%s1437] sm:$0xff]
  %v1439 = vld [vmem:[%s1437 + $0x8] sm:$0xff]
  %v1440 = vadd.f32 %v1438, %v1431
  %v1441 = vadd.f32 %v1439, %v1433
  %v1442 = vtanh.pop %v1440
  %v1443 = vtanh.pop %v1441
  %v1444 = vmul.f32 %v1442, %v751
  %v1445 = vmul.f32 %v1443, %v755
  %v1446 = vadd.f32 %v1444, %v761
  %v1447 = vadd.f32 %v1445, %v765
  %v1448 = vmul.f32 %v1446, %v1386
  %v1449 = vmul.f32 %v1446, %v1447
  %1451 = vrot.lane.b32.xlu0 %v1449, 64
  %v1452 = vpop.permute.xlu0 %1451
  %v1454 = vadd.f32 %v1448, %v1452
  %v1455 = vtanh.pop %v1454
  %v1456 = vmul.f32 %v1447, %v1455
  %v1457 = vld [vmem:[%s7] sm:$0xff]
  %v1458 = vpack.c.bf16 %v1456, %v1456
  %v1459 = vld [vmem:[%s5] sm:$0xf]
  %v1460 = vld [vmem:[%s5 + $0x4] sm:$0xf]
  %v1461 = vld [vmem:[%s5 + $0x8] sm:$0xf]
  %v1462 = vld [vmem:[%s5 + $0xc] sm:$0xf]
  %v1463 = vld [vmem:[%s5 + $0x10] sm:$0xf]
  %v1464 = vld [vmem:[%s5 + $0x14] sm:$0xf]
  %v1465 = vld [vmem:[%s5 + $0x18] sm:$0xf]
  %v1466 = vld [vmem:[%s5 + $0x1c] sm:$0xf]
  %v1467 = vld [vmem:[%s1] sm:$0xff]
  %1469 = vset.pattern.permute.xlu0 0
  %1470 = vperm.xlu0 %1469, %v1467
  %v1471 = vpop.permute.xlu0 %1470
  %v1473 = vlaneseq
  %v1474 = vshrl.u32 %v1473, 7
  %v1475 = vsub.s32 1, %v1474
  %v1476 = vrot.slane %v1457, %v1475
  %v1477 = vmul.f32 %v1471, %v1476
  %1479 = vrot.lane.b32.xlu0 %v1458, 64
  %v1480 = vpop.permute.xlu0 %1479
  %v1489 = vunpack.c.l.b16 %v1459
  %v1490 = vunpack.c.l.b16 %v1460
  %v1491 = vunpack.c.l.b16 %v1461
  %v1492 = vunpack.c.l.b16 %v1462
  %v1493 = vunpack.c.l.b16 %v1463
  %v1494 = vunpack.c.l.b16 %v1464
  %v1495 = vunpack.c.l.b16 %v1465
  %v1496 = vunpack.c.l.b16 %v1466
  %v1497 = vpack.c.b16 %v1490, %v1489
  %v1498 = vpack.c.b16 %v1492, %v1491
  %v1499 = vpack.c.b16 %v1494, %v1493
  %v1500 = vpack.c.b16 %v1496, %v1495
  %v1506 = vsel %vm697, %v1480, 0
  %1508 = vmatprep.subr.bf16.mxu0 0
  %1509 = vmatpush1.bf16.msra.mxu0 0
  %1510 = vmatprep.subr.bf16.mxu0 0
  %1511 = vmatpush1.bf16.msra.mxu0 0
  %1512 = vmatprep.subr.bf16.mxu0 0
  %1513 = vmatpush1.bf16.msra.mxu0 0
  %1514 = vmatprep.subr.bf16.mxu0 0
  %1515 = vmatpush1.bf16.msra.mxu0 0
  %1516 = vmatprep.subr.bf16.mxu0 0
  %1517 = vmatpush1.bf16.msra.mxu0 %v1500
  %1518 = vmatprep.subr.bf16.mxu0 0
  %1519 = vmatpush1.bf16.msra.mxu0 %v1499
  %1520 = vmatprep.subr.bf16.mxu0 0
  %1521 = vmatpush1.bf16.msra.mxu0 %v1498
  %1522 = vmatprep.subr.bf16.mxu0 0
  %1523 = vmatpush1.bf16.msra.mxu0 %v1497
  %1524 = vmatprep.subr.bf16.mxu0 0
  %1525 = vmatpush2.bf16.msra.mxu0 0
  %1526 = vmatprep.subr.bf16.mxu0 0
  %1527 = vmatpush2.bf16.msra.mxu0 0
  %1528 = vmatprep.subr.bf16.mxu0 0
  %1529 = vmatpush2.bf16.msra.mxu0 0
  %1530 = vmatprep.subr.bf16.mxu0 0
  %1531 = vmatpush2.bf16.msra.mxu0 0
  %1532 = vmatprep.subr.bf16.mxu0 0
  %1533 = vmatpush2.bf16.msra.mxu0 0
  %1534 = vmatprep.subr.bf16.mxu0 0
  %1535 = vmatpush2.bf16.msra.mxu0 0
  %1536 = vmatprep.subr.bf16.mxu0 0
  %1537 = vmatpush2.bf16.msra.mxu0 0
  %1538 = vmatprep.subr.bf16.mxu0 0
  %1539 = vmatpush2.bf16.msra.mxu0 0
  %1540 = vmatprep.mubr.bf16.mxu0 0
  %1541 = vmatmul.mubr.bf16.gmra.mxu0 %v1506
  %v1542 = vpop.f32.mrf.mxu0
  %v1543 = vadd.f32 %v1477, %v1542
  %v1544 = vpop.f32.mrf.mxu0
  %v1545 = vpop.f32.mrf.mxu0
  %v1546 = vpop.f32.mrf.mxu0
  %1547 = vdwg.mxu0
  %v1548 = vlaneseq
  %v1549 = vshrl.u32 %v1548, 7
  %v1550 = vsub.s32 0, %v1549
  %v1551 = vrot.slane %v1457, %v1550
  %v1552 = vadd.f32 %v1543, %v1551
  %v1553 = vmax.f32 %v1552, 0.0
  %v1554 = vpack.c.bf16 %v1553, %v1553
  %v1555 = vld [vmem:[%s6] sm:$0xf]
  %v1556 = vld [vmem:[%s6 + $0x4] sm:$0xf]
  %v1557 = vld [vmem:[%s6 + $0x8] sm:$0xf]
  %v1558 = vld [vmem:[%s6 + $0xc] sm:$0xf]
  %v1559 = vld [vmem:[%s6 + $0x10] sm:$0xf]
  %v1560 = vld [vmem:[%s6 + $0x14] sm:$0xf]
  %v1561 = vld [vmem:[%s6 + $0x18] sm:$0xf]
  %v1562 = vld [vmem:[%s6 + $0x1c] sm:$0xf]
  %v1563 = vld [vmem:[%s6 + $0x20] sm:$0xf]
  %v1564 = vld [vmem:[%s6 + $0x24] sm:$0xf]
  %v1565 = vld [vmem:[%s6 + $0x28] sm:$0xf]
  %v1566 = vld [vmem:[%s6 + $0x2c] sm:$0xf]
  %v1567 = vld [vmem:[%s6 + $0x30] sm:$0xf]
  %v1568 = vld [vmem:[%s6 + $0x34] sm:$0xf]
  %v1569 = vld [vmem:[%s6 + $0x38] sm:$0xf]
  %v1570 = vld [vmem:[%s6 + $0x3c] sm:$0xf]
  %v1571 = vlaneseq
  %v1572 = vshrl.u32 %v1571, 7
  %v1573 = vsub.s32 2, %v1572
  %v1574 = vrot.slane %v1457, %v1573
  %v1591 = vunpack.c.l.b16 %v1555
  %v1592 = vunpack.c.l.b16 %v1556
  %v1593 = vunpack.c.l.b16 %v1557
  %v1594 = vunpack.c.l.b16 %v1558
  %v1595 = vunpack.c.l.b16 %v1559
  %v1596 = vunpack.c.l.b16 %v1560
  %v1597 = vunpack.c.l.b16 %v1561
  %v1598 = vunpack.c.l.b16 %v1562
  %v1599 = vunpack.c.l.b16 %v1563
  %v1600 = vunpack.c.l.b16 %v1564
  %v1601 = vunpack.c.l.b16 %v1565
  %v1602 = vunpack.c.l.b16 %v1566
  %v1603 = vunpack.c.l.b16 %v1567
  %v1604 = vunpack.c.l.b16 %v1568
  %v1605 = vunpack.c.l.b16 %v1569
  %v1606 = vunpack.c.l.b16 %v1570
  %v1607 = vpack.c.b16 %v1592, %v1591
  %v1608 = vpack.c.b16 %v1594, %v1593
  %v1609 = vpack.c.b16 %v1596, %v1595
  %v1610 = vpack.c.b16 %v1598, %v1597
  %v1611 = vpack.c.b16 %v1600, %v1599
  %v1612 = vpack.c.b16 %v1602, %v1601
  %v1613 = vpack.c.b16 %v1604, %v1603
  %v1614 = vpack.c.b16 %v1606, %v1605
  %1623 = vmatprep.subr.bf16.mxu0 0
  %1624 = vmatpush1.bf16.msra.mxu0 %v1614
  %1625 = vmatprep.subr.bf16.mxu0 0
  %1626 = vmatpush1.bf16.msra.mxu0 %v1613
  %1627 = vmatprep.subr.bf16.mxu0 0
  %1628 = vmatpush1.bf16.msra.mxu0 %v1612
  %1629 = vmatprep.subr.bf16.mxu0 0
  %1630 = vmatpush1.bf16.msra.mxu0 %v1611
  %1631 = vmatprep.subr.bf16.mxu0 0
  %1632 = vmatpush1.bf16.msra.mxu0 %v1610
  %1633 = vmatprep.subr.bf16.mxu0 0
  %1634 = vmatpush1.bf16.msra.mxu0 %v1609
  %1635 = vmatprep.subr.bf16.mxu0 0
  %1636 = vmatpush1.bf16.msra.mxu0 %v1608
  %1637 = vmatprep.subr.bf16.mxu0 0
  %1638 = vmatpush1.bf16.msra.mxu0 %v1607
  %1639 = vmatprep.subr.bf16.mxu0 0
  %1640 = vmatpush2.bf16.msra.mxu0 0
  %1641 = vmatprep.subr.bf16.mxu0 0
  %1642 = vmatpush2.bf16.msra.mxu0 0
  %1643 = vmatprep.subr.bf16.mxu0 0
  %1644 = vmatpush2.bf16.msra.mxu0 0
  %1645 = vmatprep.subr.bf16.mxu0 0
  %1646 = vmatpush2.bf16.msra.mxu0 0
  %1647 = vmatprep.subr.bf16.mxu0 0
  %1648 = vmatpush2.bf16.msra.mxu0 0
  %1649 = vmatprep.subr.bf16.mxu0 0
  %1650 = vmatpush2.bf16.msra.mxu0 0
  %1651 = vmatprep.subr.bf16.mxu0 0
  %1652 = vmatpush2.bf16.msra.mxu0 0
  %1653 = vmatprep.subr.bf16.mxu0 0
  %1654 = vmatpush2.bf16.msra.mxu0 0
  %1655 = vmatprep.mubr.bf16.mxu0 0
  %1656 = vmatmul.mubr.bf16.gmra.mxu0 %v1554
  %v1657 = vpop.f32.mrf.mxu0
  %v1658 = vadd.f32 %v1574, %v1657
  %v1659 = vpop.f32.mrf.mxu0
  %v1660 = vpop.f32.mrf.mxu0
  %v1661 = vpop.f32.mrf.mxu0
  %1662 = vdwg.mxu0
  %1663 = vmax.xlane.f32.xlu0 %v1658
  %v1664 = vpop.xlane.xlu0 %1663
  %v1665 = vsub.f32 %v1658, %v1664
  %v1666 = vmul.f32 %v1665, 1.442695
  %v1667 = vpow.pop %v1666
  %1668 = vadd.xlane.f32.xlu0 %v1667
  %v1669 = vpop.xlane.xlu0 %1668
  %v1670 = vrcp.pop %v1669
  %v1671 = vmul.f32 %v1667, %v1670
  %1672 = vst [vmem:[%s8] sm:$0xff] %v1671
  // Predicated region
  $region34: #{lstm_model_forward.1} parent=0 // pred_check
    _
  $region35: #{lstm_model_forward.1} parent=0 // pred_check_branch
    %1674 = sbr.rel (0) target = $region37
  $region36: #{lstm_model_forward.1} parent=0 // pred_region
    _
  $region37: #{lstm_model_forward.1} parent=0 // pred_fallthru
    _
  // Predicated region
  $region38: #{lstm_model_forward.1} parent=0 // pred_check
    _
  $region39: #{lstm_model_forward.1} parent=0 // pred_check_branch
    %1676 = sbr.rel (0) target = $region41
  $region40: #{lstm_model_forward.1} parent=0 // pred_region
    _
  $region41: #{lstm_model_forward.1} parent=0 // pred_fallthru
    _

</llo_original>
